<compile_context>
chip_gen: v5e
topology: v5e:2x2
jax: 0.10.0
libtpu: 0.0.40
codegen_flags: <defaults>
</compile_context>

<pallas_src>
import functools

import jax
import jax.numpy as jnp
from jax.experimental import pallas as pl
from jax.experimental.pallas import tpu as pltpu

EMB = 32          # emb_size
HID = 128         # conv hidden channels
KSZ = 3           # conv kernel size
N_MID = 6         # cnn11..cnn16
LEAKY_SLOPE = 0.01
BN_EPS = 1e-5


# ---------------------------------------------------------------------------
# Pallas kernel
# ---------------------------------------------------------------------------
def len_predictor_kernel(x_ref, wf_ref, bf_ref, wm_ref, bm_ref, wl_ref,
                         scal_ref, o_ref, *, seq_len):
    M = x_ref.shape[0]                      # M = block_b * L rows
    L = seq_len

    # Per-sample sequence-boundary masks, broadcast ONCE (reused by all layers).
    row = jax.lax.broadcasted_iota(jnp.int32, (M, 1), 0)
    nf_col = (row % L) != 0                 # row has a left neighbour in its sample
    nl_col = (row % L) != (L - 1)           # row has a right neighbour in its sample
    nf_h = jnp.broadcast_to(nf_col, (M, HID))
    nl_h = jnp.broadcast_to(nl_col, (M, HID))
    zero_h = jnp.zeros((M, HID), jnp.float32)

    def leaky(t):
        return jnp.where(t > 0, t, LEAKY_SLOPE * t)

    def conv3(h_bf16, w0, w1, w2, b_f32):
        """Conv1d(k=3, pad=1) + folded BN.

        3 per-tap bf16 matmuls (f32 accumulate); the stencil shift + zero-pad
        masking is applied to the MXU outputs (no (M, 3*Cin) temporary).
        h_bf16: (M, Cin) bf16   w*: (Cin, HID) bf16   b: (1, HID) f32
        """
        p0 = jnp.dot(h_bf16, w0, preferred_element_type=jnp.float32)
        p1 = jnp.dot(h_bf16, w1, preferred_element_type=jnp.float32)
        p2 = jnp.dot(h_bf16, w2, preferred_element_type=jnp.float32)
        y = jnp.where(nf_h, pltpu.roll(p0, shift=1, axis=0), zero_h)      # p0[l-1]
        y = y + p1 + b_f32
        y = y + jnp.where(nl_h, pltpu.roll(p2, shift=M - 1, axis=0), zero_h)  # p2[l+1]
        return y

    # cnn1 + bn1 (folded) + leaky   (activations already bf16 from the wrapper)
    y = leaky(conv3(x_ref[...], wf_ref[0], wf_ref[1], wf_ref[2], bf_ref[...]))

    # cnn11..cnn16 + bn (folded) + leaky — fully unrolled, static weight slices.
    for i in range(N_MID):
        h = y.astype(jnp.bfloat16)          # one (M, HID) cast per layer (dot input)
        y = leaky(conv3(h,
                        wm_ref[3 * i + 0], wm_ref[3 * i + 1], wm_ref[3 * i + 2],
                        bm_ref[i]))

    # cnn2: 128 -> 1 channel == per-position lane reduction (kept in f32).
    wl = wl_ref[...]                                             # (3, HID) f32
    y_prev = jnp.where(nf_h, pltpu.roll(y, shift=1, axis=0), zero_h)
    y_next = jnp.where(nl_h, pltpu.roll(y, shift=M - 1, axis=0), zero_h)
    z = y_prev * wl[0] + y * wl[1] + y_next * wl[2]
    s = jnp.sum(z, axis=-1, keepdims=True)                       # (M, 1)

    b_last = scal_ref[0]
    norm_std = scal_ref[1]
    norm_mean = scal_ref[2]
    o_ref[...] = (s + b_last) * norm_std + norm_mean


def _pick_block_b(batch, seq_len, target_rows=1024, max_rows=4096):
    """Samples per grid step.

    Big blocks amortize the ~0.35us per-step overhead (target >= 1024 rows),
    bounded by max_rows; rows must be 16-aligned (bf16 sublane tile) unless the
    block covers the whole array; and keep >= 2 grid steps when the batch allows
    it so v7x's two TensorCores both get work.
    """
    divisors = [d for d in range(1, batch + 1) if batch % d == 0]
    valid = [d for d in divisors if (d * seq_len) % 16 == 0]
    if batch not in valid:
        valid.append(batch)       # full-array block is always a legal tiling
    best = None
    for d in valid:
        if d * seq_len >= target_rows:
            best = d
            break
    if best is None:
        best = valid[-1]
    while best * seq_len > max_rows:
        smaller = [d for d in valid if d < best]
        if not smaller:
            break
        best = smaller[-1]
    # v7x megacore: prefer >= 2 grid steps so "parallel" can shard across cores.
    if batch // best == 1 and batch > 1:
        smaller = [d for d in valid if d <= batch // 2]
        if smaller:
            best = smaller[-1]
    return best


def len_predictor_pallas(x, wf, bf, wm, bm, wl, scal, block_b=None):
    B, L, C = x.shape
    if block_b is None:
        block_b = _pick_block_b(B, L)
    assert B % block_b == 0
    rows = block_b * L

    # Wrapper-side reshape + single bf16 cast: halves the only per-step HBM DMA.
    x2 = x.reshape(B * L, C).astype(jnp.bfloat16)

    out = pl.pallas_call(
        functools.partial(len_predictor_kernel, seq_len=L),
        out_shape=jax.ShapeDtypeStruct((B * L, 1), jnp.float32),
        grid_spec=pltpu.PrefetchScalarGridSpec(
            num_scalar_prefetch=0,
            grid=(B // block_b,),
            in_specs=[
                pl.BlockSpec((rows, C), lambda b: (b, 0)),           # activations bf16
                pl.BlockSpec(wf.shape, lambda b: (0, 0, 0)),         # (3, 2E, HID) bf16
                pl.BlockSpec(bf.shape, lambda b: (0, 0)),            # (1, HID) f32
                pl.BlockSpec(wm.shape, lambda b: (0, 0, 0)),         # (18, HID, HID) bf16
                pl.BlockSpec(bm.shape, lambda b: (0, 0, 0)),         # (6, 1, HID) f32
                pl.BlockSpec(wl.shape, lambda b: (0, 0)),            # (3, HID) f32
                pl.BlockSpec(memory_space=pltpu.MemorySpace.SMEM),   # [b_last, std, mean]
            ],
            out_specs=pl.BlockSpec((rows, 1), lambda b: (b, 0)),
        ),
        compiler_params=pltpu.CompilerParams(
            dimension_semantics=("parallel",)),
    )(x2, wf, bf, wm, bm, wl, scal)
    return out.reshape(B, L)


# ---------------------------------------------------------------------------
# Deterministic parameter init (synthetic; shapes from LenPredictor.__init__)
# ---------------------------------------------------------------------------
def init_params(key, n_tokens=100, n_speakers=99):
    keys = iter(jax.random.split(key, 64))
    p = {}
    tok = jax.random.normal(next(keys), (n_tokens + 1, EMB), jnp.float32) * 0.5
    p['token_emb'] = tok.at[n_tokens].set(0.0)       # padding_idx=n_tokens
    p['spk_emb'] = jax.random.normal(next(keys), (n_speakers, EMB), jnp.float32) * 0.5

    convs = []
    cins = [2 * EMB] + [HID] * N_MID
    for cin in cins:
        cout = HID
        convs.append(dict(
            w=jax.random.normal(next(keys), (cout, cin, KSZ), jnp.float32)
              * (1.0 / jnp.sqrt(cin * KSZ)),
            b=0.1 * jax.random.normal(next(keys), (cout,), jnp.float32),
            gamma=1.0 + 0.1 * jax.random.normal(next(keys), (cout,), jnp.float32),
            beta=0.1 * jax.random.normal(next(keys), (cout,), jnp.float32),
            mean=0.1 * jax.random.normal(next(keys), (cout,), jnp.float32),
            var=1.0 + 0.5 * jax.random.uniform(next(keys), (cout,), jnp.float32),
        ))
    p['convs'] = convs
    p['w_last'] = jax.random.normal(next(keys), (1, HID, KSZ), jnp.float32) \
        * (1.0 / jnp.sqrt(HID * KSZ))
    p['b_last'] = 0.1 * jax.random.normal(next(keys), (1,), jnp.float32)
    return p


def fold_params(p):
    """Fold eval-mode BatchNorm into conv weights (exact), split into per-tap
    (Cin, Cout) matrices, and cast the MXU operands to bf16."""
    def fold(layer):
        s = layer['gamma'] / jnp.sqrt(layer['var'] + BN_EPS)            # (Cout,)
        w = layer['w'] * s[:, None, None]                               # (Cout,Cin,3)
        wk = jnp.stack([w[:, :, k].T for k in range(KSZ)], axis=0)      # (3,Cin,Cout)
        b = (layer['b'] - layer['mean']) * s + layer['beta']            # (Cout,)
        return wk.astype(jnp.bfloat16), b.astype(jnp.float32)

    wf, bf = fold(p['convs'][0])                                        # (3,2E,HID),(HID,)
    mids = [fold(l) for l in p['convs'][1:]]
    wm = jnp.concatenate([m[0] for m in mids], axis=0)                  # (18,HID,HID) bf16
    bm = jnp.stack([m[1] for m in mids], axis=0)[:, None, :]            # (6,1,HID) f32
    wl = jnp.stack([p['w_last'][0, :, k] for k in range(KSZ)], axis=0)  # (3,HID) f32
    bl = p['b_last'][0]
    return wf, bf[None, :], wm, bm, wl, bl


# ---------------------------------------------------------------------------
# Pure-JAX reference (mirrors the PyTorch NCL forward, full f32)
# ---------------------------------------------------------------------------
def reference_forward(seq, spk_id, p, norm_mean, norm_std):
    emb_seq = p['token_emb'][seq]                                       # (B,L,EMB)
    emb_spk = jnp.repeat(p['spk_emb'][spk_id], seq.shape[-1], axis=1)   # (B,L,EMB)
    h = jnp.concatenate([emb_seq, emb_spk], axis=-1).transpose(0, 2, 1) # (B,C,L)

    def conv1d(h, w, b):
        L = h.shape[2]
        hp = jnp.pad(h, ((0, 0), (0, 0), (1, 1)))
        out = jnp.broadcast_to(b[None, :, None], (h.shape[0], w.shape[0], L))
        for k in range(KSZ):
            out = out + jnp.einsum('bcl,oc->bol', hp[:, :, k:k + L], w[:, :, k],
                                   precision=jax.lax.Precision.HIGHEST)
        return out

    def bn(h, l):
        return ((h - l['mean'][None, :, None])
                / jnp.sqrt(l['var'][None, :, None] + BN_EPS)
                * l['gamma'][None, :, None] + l['beta'][None, :, None])

    leaky = lambda t: jnp.where(t > 0, t, LEAKY_SLOPE * t)
    for l in p['convs']:
        h = leaky(bn(conv1d(h, l['w'], l['b']), l))
    out = conv1d(h, p['w_last'], p['b_last'])[:, 0, :]                  # (B,L)
    return out * norm_std + norm_mean


# ---------------------------------------------------------------------------
if __name__ == "__main__":
    key = jax.random.PRNGKey(0)
    kp, ks, kspk = jax.random.split(key, 3)

    B, L = 2, 16
    n_tokens, n_speakers = 100, 99
    params = init_params(kp, n_tokens, n_speakers)

    seq = jax.random.randint(ks, (B, L), 0, n_tokens + 1)     # may include padding idx
    spk_id = jax.random.randint(kspk, (B, 1), 0, n_speakers)
    norm_mean = jnp.float32(0.0)
    norm_std = jnp.float32(1.0)

    # glue: embedding gather + speaker repeat + concat  -> (B, L, 2*EMB)
    emb_seq = params['token_emb'][seq]
    emb_spk = jnp.repeat(params['spk_emb'][spk_id], L, axis=1)
    x = jnp.concatenate([emb_seq, emb_spk], axis=-1).astype(jnp.float32)

    wf, bf, wm, bm, wl, bl = fold_params(params)
    scal = jnp.array([bl, norm_std, norm_mean], jnp.float32)

    out = len_predictor_pallas(x, wf, bf, wm, bm, wl, scal)
    out = jax.block_until_ready(out)

    ref = reference_forward(seq, spk_id, params, norm_mean, norm_std)
    assert out.shape == (B, L), out.shape
    # bf16 MXU operands (weights + activations) with f32 accumulation ->
    # relaxed tolerance vs the all-f32 reference.
    assert jnp.allclose(out, ref, atol=5e-2, rtol=5e-2), (
        f"max abs diff {float(jnp.max(jnp.abs(out - ref)))}")

    print("KERNEL_OK")
</pallas_src>

<mosaic_0001>
module attributes {stable_mosaic.version = 11 : i64} {
  func.func @len_predictor_kernel(%arg0: i32, %arg1: memref<16x64xbf16, #tpu.memory_space<vmem>>, %arg2: memref<3x64x128xbf16, #tpu.memory_space<vmem>>, %arg3: memref<1x128xf32, #tpu.memory_space<vmem>>, %arg4: memref<18x128x128xbf16, #tpu.memory_space<vmem>>, %arg5: memref<6x1x128xf32, #tpu.memory_space<vmem>>, %arg6: memref<3x128xf32, #tpu.memory_space<vmem>>, %arg7: memref<3xf32, #tpu.memory_space<smem>>, %arg8: memref<16x1xf32, #tpu.memory_space<vmem>>) attributes {dimension_semantics = [#tpu.dimension_semantics<parallel>], iteration_bounds = array<i64: 2>, scalar_prefetch = 0 : i64, scratch_operands = 0 : i64, tpu.core_type = #tpu.core_type<tc>, window_params = [{transform_indices = @transform_0, window_bounds = array<i64: 16, 64>}, {pipeline_mode = #tpu.pipeline_mode<synchronous>, transform_indices = @transform_1, window_bounds = array<i64: 3, 64, 128>}, {pipeline_mode = #tpu.pipeline_mode<synchronous>, transform_indices = @transform_2, window_bounds = array<i64: 1, 128>}, {pipeline_mode = #tpu.pipeline_mode<synchronous>, transform_indices = @transform_3, window_bounds = array<i64: 18, 128, 128>}, {pipeline_mode = #tpu.pipeline_mode<synchronous>, transform_indices = @transform_4, window_bounds = array<i64: 6, 1, 128>}, {pipeline_mode = #tpu.pipeline_mode<synchronous>, transform_indices = @transform_5, window_bounds = array<i64: 3, 128>}, {transform_indices = @transform_6, window_bounds = array<i64: 3>}, {transform_indices = @transform_7, window_bounds = array<i64: 16, 1>}]} {
    %0 = tpu.iota {dimensions = array<i32: 0>} : vector<16x1xi32>
    %c16_i32 = arith.constant 16 : i32
    %c0_i32 = arith.constant 0 : i32
    %1 = arith.cmpi eq, %c16_i32, %c0_i32 : i32
    %c1_i32 = arith.constant 1 : i32
    %2 = arith.select %1, %c1_i32, %c16_i32 : i32
    %3 = vector.broadcast %2 : i32 to vector<16x1xi32>
    %4 = arith.remsi %0, %3 : vector<16x1xi32>
    %c0_i32_0 = arith.constant 0 : i32
    %5 = vector.broadcast %c0_i32_0 : i32 to vector<16x1xi32>
    %6 = arith.cmpi ne, %4, %5 : vector<16x1xi32>
    %c0_i32_1 = arith.constant 0 : i32
    %7 = vector.broadcast %c0_i32_1 : i32 to vector<16x1xi32>
    %8 = arith.cmpi slt, %4, %7 : vector<16x1xi32>
    %c0_i32_2 = arith.constant 0 : i32
    %9 = arith.cmpi slt, %2, %c0_i32_2 : i32
    %10 = vector.broadcast %9 : i1 to vector<16x1xi1>
    %11 = vector.broadcast %10 : vector<16x1xi1> to vector<16x1xi1>
    %12 = arith.xori %8, %11 : vector<16x1xi1>
    %13 = arith.andi %12, %6 : vector<16x1xi1>
    %14 = vector.broadcast %2 : i32 to vector<16x1xi32>
    %15 = arith.addi %4, %14 : vector<16x1xi32>
    %16 = arith.select %13, %15, %4 : vector<16x1xi1>, vector<16x1xi32>
    %c0_i32_3 = arith.constant 0 : i32
    %17 = vector.broadcast %c0_i32_3 : i32 to vector<16x1xi32>
    %18 = arith.cmpi ne, %16, %17 : vector<16x1xi32>
    %c16_i32_4 = arith.constant 16 : i32
    %c0_i32_5 = arith.constant 0 : i32
    %19 = arith.cmpi eq, %c16_i32_4, %c0_i32_5 : i32
    %c1_i32_6 = arith.constant 1 : i32
    %20 = arith.select %19, %c1_i32_6, %c16_i32_4 : i32
    %21 = vector.broadcast %20 : i32 to vector<16x1xi32>
    %22 = arith.remsi %0, %21 : vector<16x1xi32>
    %c0_i32_7 = arith.constant 0 : i32
    %23 = vector.broadcast %c0_i32_7 : i32 to vector<16x1xi32>
    %24 = arith.cmpi ne, %22, %23 : vector<16x1xi32>
    %c0_i32_8 = arith.constant 0 : i32
    %25 = vector.broadcast %c0_i32_8 : i32 to vector<16x1xi32>
    %26 = arith.cmpi slt, %22, %25 : vector<16x1xi32>
    %c0_i32_9 = arith.constant 0 : i32
    %27 = arith.cmpi slt, %20, %c0_i32_9 : i32
    %28 = vector.broadcast %27 : i1 to vector<16x1xi1>
    %29 = vector.broadcast %28 : vector<16x1xi1> to vector<16x1xi1>
    %30 = arith.xori %26, %29 : vector<16x1xi1>
    %31 = arith.andi %30, %24 : vector<16x1xi1>
    %32 = vector.broadcast %20 : i32 to vector<16x1xi32>
    %33 = arith.addi %22, %32 : vector<16x1xi32>
    %34 = arith.select %31, %33, %22 : vector<16x1xi1>, vector<16x1xi32>
    %c15_i32 = arith.constant 15 : i32
    %35 = vector.broadcast %c15_i32 : i32 to vector<16x1xi32>
    %36 = arith.cmpi ne, %34, %35 : vector<16x1xi32>
    %37 = vector.shape_cast %18 : vector<16x1xi1> to vector<16x1xi1>
    %38 = vector.broadcast %37 : vector<16x1xi1> to vector<16x128xi1>
    %39 = vector.shape_cast %36 : vector<16x1xi1> to vector<16x1xi1>
    %40 = vector.broadcast %39 : vector<16x1xi1> to vector<16x128xi1>
    %cst = arith.constant 0.000000e+00 : f32
    %41 = vector.broadcast %cst : f32 to vector<16x128xf32>
    %c0 = arith.constant 0 : index
    %c0_10 = arith.constant 0 : index
    %42 = vector.load %arg1[%c0, %c0_10] : memref<16x64xbf16, #tpu.memory_space<vmem>>, vector<16x64xbf16>
    %c0_11 = arith.constant 0 : index
    %c0_12 = arith.constant 0 : index
    %c0_13 = arith.constant 0 : index
    %43 = vector.load %arg2[%c0_11, %c0_12, %c0_13] : memref<3x64x128xbf16, #tpu.memory_space<vmem>>, vector<1x64x128xbf16>
    %44 = vector.shape_cast %43 : vector<1x64x128xbf16> to vector<64x128xbf16>
    %c1 = arith.constant 1 : index
    %c0_14 = arith.constant 0 : index
    %c0_15 = arith.constant 0 : index
    %45 = vector.load %arg2[%c1, %c0_14, %c0_15] : memref<3x64x128xbf16, #tpu.memory_space<vmem>>, vector<1x64x128xbf16>
    %46 = vector.shape_cast %45 : vector<1x64x128xbf16> to vector<64x128xbf16>
    %c2 = arith.constant 2 : index
    %c0_16 = arith.constant 0 : index
    %c0_17 = arith.constant 0 : index
    %47 = vector.load %arg2[%c2, %c0_16, %c0_17] : memref<3x64x128xbf16, #tpu.memory_space<vmem>>, vector<1x64x128xbf16>
    %48 = vector.shape_cast %47 : vector<1x64x128xbf16> to vector<64x128xbf16>
    %c0_18 = arith.constant 0 : index
    %c0_19 = arith.constant 0 : index
    %49 = vector.load %arg3[%c0_18, %c0_19] : memref<1x128xf32, #tpu.memory_space<vmem>>, vector<1x128xf32>
    %cst_20 = arith.constant dense<0.000000e+00> : vector<16x128xf32>
    %50 = tpu.matmul %42, %44, %cst_20 {dimension_numbers = #tpu.dot_dimension_numbers<[1], [0], [0], [1], [0, 0, 1, 1], [], []>} : vector<16x64xbf16>, vector<64x128xbf16>, vector<16x128xf32> -> vector<16x128xf32>
    %cst_21 = arith.constant dense<0.000000e+00> : vector<16x128xf32>
    %51 = tpu.matmul %42, %46, %cst_21 {dimension_numbers = #tpu.dot_dimension_numbers<[1], [0], [0], [1], [0, 0, 1, 1], [], []>} : vector<16x64xbf16>, vector<64x128xbf16>, vector<16x128xf32> -> vector<16x128xf32>
    %cst_22 = arith.constant dense<0.000000e+00> : vector<16x128xf32>
    %52 = tpu.matmul %42, %48, %cst_22 {dimension_numbers = #tpu.dot_dimension_numbers<[1], [0], [0], [1], [0, 0, 1, 1], [], []>} : vector<16x64xbf16>, vector<64x128xbf16>, vector<16x128xf32> -> vector<16x128xf32>
    %c1_i32_23 = arith.constant 1 : i32
    %53 = tpu.dynamic_rotate %50 by %c1_i32_23 dim 0 : vector<16x128xf32>, i32 -> vector<16x128xf32>
    %54 = arith.select %38, %53, %41 : vector<16x128xi1>, vector<16x128xf32>
    %55 = arith.addf %54, %51 : vector<16x128xf32>
    %56 = vector.broadcast %49 : vector<1x128xf32> to vector<16x128xf32>
    %57 = arith.addf %55, %56 : vector<16x128xf32>
    %c15_i32_24 = arith.constant 15 : i32
    %58 = tpu.dynamic_rotate %52 by %c15_i32_24 dim 0 : vector<16x128xf32>, i32 -> vector<16x128xf32>
    %59 = arith.select %40, %58, %41 : vector<16x128xi1>, vector<16x128xf32>
    %60 = arith.addf %57, %59 : vector<16x128xf32>
    %cst_25 = arith.constant 0.000000e+00 : f32
    %61 = vector.broadcast %cst_25 : f32 to vector<16x128xf32>
    %62 = arith.cmpf ogt, %60, %61 : vector<16x128xf32>
    %cst_26 = arith.constant 0.00999999977 : f32
    %63 = vector.broadcast %cst_26 : f32 to vector<16x128xf32>
    %64 = arith.mulf %63, %60 : vector<16x128xf32>
    %65 = arith.select %62, %60, %64 : vector<16x128xi1>, vector<16x128xf32>
    %66 = arith.truncf %65 : vector<16x128xf32> to vector<16x128xbf16>
    %c0_27 = arith.constant 0 : index
    %c0_28 = arith.constant 0 : index
    %c0_29 = arith.constant 0 : index
    %67 = vector.load %arg4[%c0_27, %c0_28, %c0_29] : memref<18x128x128xbf16, #tpu.memory_space<vmem>>, vector<1x128x128xbf16>
    %68 = vector.shape_cast %67 : vector<1x128x128xbf16> to vector<128x128xbf16>
    %c1_30 = arith.constant 1 : index
    %c0_31 = arith.constant 0 : index
    %c0_32 = arith.constant 0 : index
    %69 = vector.load %arg4[%c1_30, %c0_31, %c0_32] : memref<18x128x128xbf16, #tpu.memory_space<vmem>>, vector<1x128x128xbf16>
    %70 = vector.shape_cast %69 : vector<1x128x128xbf16> to vector<128x128xbf16>
    %c2_33 = arith.constant 2 : index
    %c0_34 = arith.constant 0 : index
    %c0_35 = arith.constant 0 : index
    %71 = vector.load %arg4[%c2_33, %c0_34, %c0_35] : memref<18x128x128xbf16, #tpu.memory_space<vmem>>, vector<1x128x128xbf16>
    %72 = vector.shape_cast %71 : vector<1x128x128xbf16> to vector<128x128xbf16>
    %c0_36 = arith.constant 0 : index
    %c0_37 = arith.constant 0 : index
    %c0_38 = arith.constant 0 : index
    %73 = vector.load %arg5[%c0_36, %c0_37, %c0_38] : memref<6x1x128xf32, #tpu.memory_space<vmem>>, vector<1x1x128xf32>
    %74 = vector.shape_cast %73 : vector<1x1x128xf32> to vector<1x128xf32>
    %cst_39 = arith.constant dense<0.000000e+00> : vector<16x128xf32>
    %75 = tpu.matmul %66, %68, %cst_39 {dimension_numbers = #tpu.dot_dimension_numbers<[1], [0], [0], [1], [0, 0, 1, 1], [], []>} : vector<16x128xbf16>, vector<128x128xbf16>, vector<16x128xf32> -> vector<16x128xf32>
    %cst_40 = arith.constant dense<0.000000e+00> : vector<16x128xf32>
    %76 = tpu.matmul %66, %70, %cst_40 {dimension_numbers = #tpu.dot_dimension_numbers<[1], [0], [0], [1], [0, 0, 1, 1], [], []>} : vector<16x128xbf16>, vector<128x128xbf16>, vector<16x128xf32> -> vector<16x128xf32>
    %cst_41 = arith.constant dense<0.000000e+00> : vector<16x128xf32>
    %77 = tpu.matmul %66, %72, %cst_41 {dimension_numbers = #tpu.dot_dimension_numbers<[1], [0], [0], [1], [0, 0, 1, 1], [], []>} : vector<16x128xbf16>, vector<128x128xbf16>, vector<16x128xf32> -> vector<16x128xf32>
    %c1_i32_42 = arith.constant 1 : i32
    %78 = tpu.dynamic_rotate %75 by %c1_i32_42 dim 0 : vector<16x128xf32>, i32 -> vector<16x128xf32>
    %79 = arith.select %38, %78, %41 : vector<16x128xi1>, vector<16x128xf32>
    %80 = arith.addf %79, %76 : vector<16x128xf32>
    %81 = vector.broadcast %74 : vector<1x128xf32> to vector<16x128xf32>
    %82 = arith.addf %80, %81 : vector<16x128xf32>
    %c15_i32_43 = arith.constant 15 : i32
    %83 = tpu.dynamic_rotate %77 by %c15_i32_43 dim 0 : vector<16x128xf32>, i32 -> vector<16x128xf32>
    %84 = arith.select %40, %83, %41 : vector<16x128xi1>, vector<16x128xf32>
    %85 = arith.addf %82, %84 : vector<16x128xf32>
    %cst_44 = arith.constant 0.000000e+00 : f32
    %86 = vector.broadcast %cst_44 : f32 to vector<16x128xf32>
    %87 = arith.cmpf ogt, %85, %86 : vector<16x128xf32>
    %cst_45 = arith.constant 0.00999999977 : f32
    %88 = vector.broadcast %cst_45 : f32 to vector<16x128xf32>
    %89 = arith.mulf %88, %85 : vector<16x128xf32>
    %90 = arith.select %87, %85, %89 : vector<16x128xi1>, vector<16x128xf32>
    %91 = arith.truncf %90 : vector<16x128xf32> to vector<16x128xbf16>
    %c3 = arith.constant 3 : index
    %c0_46 = arith.constant 0 : index
    %c0_47 = arith.constant 0 : index
    %92 = vector.load %arg4[%c3, %c0_46, %c0_47] : memref<18x128x128xbf16, #tpu.memory_space<vmem>>, vector<1x128x128xbf16>
    %93 = vector.shape_cast %92 : vector<1x128x128xbf16> to vector<128x128xbf16>
    %c4 = arith.constant 4 : index
    %c0_48 = arith.constant 0 : index
    %c0_49 = arith.constant 0 : index
    %94 = vector.load %arg4[%c4, %c0_48, %c0_49] : memref<18x128x128xbf16, #tpu.memory_space<vmem>>, vector<1x128x128xbf16>
    %95 = vector.shape_cast %94 : vector<1x128x128xbf16> to vector<128x128xbf16>
    %c5 = arith.constant 5 : index
    %c0_50 = arith.constant 0 : index
    %c0_51 = arith.constant 0 : index
    %96 = vector.load %arg4[%c5, %c0_50, %c0_51] : memref<18x128x128xbf16, #tpu.memory_space<vmem>>, vector<1x128x128xbf16>
    %97 = vector.shape_cast %96 : vector<1x128x128xbf16> to vector<128x128xbf16>
    %c1_52 = arith.constant 1 : index
    %c0_53 = arith.constant 0 : index
    %c0_54 = arith.constant 0 : index
    %98 = vector.load %arg5[%c1_52, %c0_53, %c0_54] : memref<6x1x128xf32, #tpu.memory_space<vmem>>, vector<1x1x128xf32>
    %99 = vector.shape_cast %98 : vector<1x1x128xf32> to vector<1x128xf32>
    %cst_55 = arith.constant dense<0.000000e+00> : vector<16x128xf32>
    %100 = tpu.matmul %91, %93, %cst_55 {dimension_numbers = #tpu.dot_dimension_numbers<[1], [0], [0], [1], [0, 0, 1, 1], [], []>} : vector<16x128xbf16>, vector<128x128xbf16>, vector<16x128xf32> -> vector<16x128xf32>
    %cst_56 = arith.constant dense<0.000000e+00> : vector<16x128xf32>
    %101 = tpu.matmul %91, %95, %cst_56 {dimension_numbers = #tpu.dot_dimension_numbers<[1], [0], [0], [1], [0, 0, 1, 1], [], []>} : vector<16x128xbf16>, vector<128x128xbf16>, vector<16x128xf32> -> vector<16x128xf32>
    %cst_57 = arith.constant dense<0.000000e+00> : vector<16x128xf32>
    %102 = tpu.matmul %91, %97, %cst_57 {dimension_numbers = #tpu.dot_dimension_numbers<[1], [0], [0], [1], [0, 0, 1, 1], [], []>} : vector<16x128xbf16>, vector<128x128xbf16>, vector<16x128xf32> -> vector<16x128xf32>
    %c1_i32_58 = arith.constant 1 : i32
    %103 = tpu.dynamic_rotate %100 by %c1_i32_58 dim 0 : vector<16x128xf32>, i32 -> vector<16x128xf32>
    %104 = arith.select %38, %103, %41 : vector<16x128xi1>, vector<16x128xf32>
    %105 = arith.addf %104, %101 : vector<16x128xf32>
    %106 = vector.broadcast %99 : vector<1x128xf32> to vector<16x128xf32>
    %107 = arith.addf %105, %106 : vector<16x128xf32>
    %c15_i32_59 = arith.constant 15 : i32
    %108 = tpu.dynamic_rotate %102 by %c15_i32_59 dim 0 : vector<16x128xf32>, i32 -> vector<16x128xf32>
    %109 = arith.select %40, %108, %41 : vector<16x128xi1>, vector<16x128xf32>
    %110 = arith.addf %107, %109 : vector<16x128xf32>
    %cst_60 = arith.constant 0.000000e+00 : f32
    %111 = vector.broadcast %cst_60 : f32 to vector<16x128xf32>
    %112 = arith.cmpf ogt, %110, %111 : vector<16x128xf32>
    %cst_61 = arith.constant 0.00999999977 : f32
    %113 = vector.broadcast %cst_61 : f32 to vector<16x128xf32>
    %114 = arith.mulf %113, %110 : vector<16x128xf32>
    %115 = arith.select %112, %110, %114 : vector<16x128xi1>, vector<16x128xf32>
    %116 = arith.truncf %115 : vector<16x128xf32> to vector<16x128xbf16>
    %c6 = arith.constant 6 : index
    %c0_62 = arith.constant 0 : index
    %c0_63 = arith.constant 0 : index
    %117 = vector.load %arg4[%c6, %c0_62, %c0_63] : memref<18x128x128xbf16, #tpu.memory_space<vmem>>, vector<1x128x128xbf16>
    %118 = vector.shape_cast %117 : vector<1x128x128xbf16> to vector<128x128xbf16>
    %c7 = arith.constant 7 : index
    %c0_64 = arith.constant 0 : index
    %c0_65 = arith.constant 0 : index
    %119 = vector.load %arg4[%c7, %c0_64, %c0_65] : memref<18x128x128xbf16, #tpu.memory_space<vmem>>, vector<1x128x128xbf16>
    %120 = vector.shape_cast %119 : vector<1x128x128xbf16> to vector<128x128xbf16>
    %c8 = arith.constant 8 : index
    %c0_66 = arith.constant 0 : index
    %c0_67 = arith.constant 0 : index
    %121 = vector.load %arg4[%c8, %c0_66, %c0_67] : memref<18x128x128xbf16, #tpu.memory_space<vmem>>, vector<1x128x128xbf16>
    %122 = vector.shape_cast %121 : vector<1x128x128xbf16> to vector<128x128xbf16>
    %c2_68 = arith.constant 2 : index
    %c0_69 = arith.constant 0 : index
    %c0_70 = arith.constant 0 : index
    %123 = vector.load %arg5[%c2_68, %c0_69, %c0_70] : memref<6x1x128xf32, #tpu.memory_space<vmem>>, vector<1x1x128xf32>
    %124 = vector.shape_cast %123 : vector<1x1x128xf32> to vector<1x128xf32>
    %cst_71 = arith.constant dense<0.000000e+00> : vector<16x128xf32>
    %125 = tpu.matmul %116, %118, %cst_71 {dimension_numbers = #tpu.dot_dimension_numbers<[1], [0], [0], [1], [0, 0, 1, 1], [], []>} : vector<16x128xbf16>, vector<128x128xbf16>, vector<16x128xf32> -> vector<16x128xf32>
    %cst_72 = arith.constant dense<0.000000e+00> : vector<16x128xf32>
    %126 = tpu.matmul %116, %120, %cst_72 {dimension_numbers = #tpu.dot_dimension_numbers<[1], [0], [0], [1], [0, 0, 1, 1], [], []>} : vector<16x128xbf16>, vector<128x128xbf16>, vector<16x128xf32> -> vector<16x128xf32>
    %cst_73 = arith.constant dense<0.000000e+00> : vector<16x128xf32>
    %127 = tpu.matmul %116, %122, %cst_73 {dimension_numbers = #tpu.dot_dimension_numbers<[1], [0], [0], [1], [0, 0, 1, 1], [], []>} : vector<16x128xbf16>, vector<128x128xbf16>, vector<16x128xf32> -> vector<16x128xf32>
    %c1_i32_74 = arith.constant 1 : i32
    %128 = tpu.dynamic_rotate %125 by %c1_i32_74 dim 0 : vector<16x128xf32>, i32 -> vector<16x128xf32>
    %129 = arith.select %38, %128, %41 : vector<16x128xi1>, vector<16x128xf32>
    %130 = arith.addf %129, %126 : vector<16x128xf32>
    %131 = vector.broadcast %124 : vector<1x128xf32> to vector<16x128xf32>
    %132 = arith.addf %130, %131 : vector<16x128xf32>
    %c15_i32_75 = arith.constant 15 : i32
    %133 = tpu.dynamic_rotate %127 by %c15_i32_75 dim 0 : vector<16x128xf32>, i32 -> vector<16x128xf32>
    %134 = arith.select %40, %133, %41 : vector<16x128xi1>, vector<16x128xf32>
    %135 = arith.addf %132, %134 : vector<16x128xf32>
    %cst_76 = arith.constant 0.000000e+00 : f32
    %136 = vector.broadcast %cst_76 : f32 to vector<16x128xf32>
    %137 = arith.cmpf ogt, %135, %136 : vector<16x128xf32>
    %cst_77 = arith.constant 0.00999999977 : f32
    %138 = vector.broadcast %cst_77 : f32 to vector<16x128xf32>
    %139 = arith.mulf %138, %135 : vector<16x128xf32>
    %140 = arith.select %137, %135, %139 : vector<16x128xi1>, vector<16x128xf32>
    %141 = arith.truncf %140 : vector<16x128xf32> to vector<16x128xbf16>
    %c9 = arith.constant 9 : index
    %c0_78 = arith.constant 0 : index
    %c0_79 = arith.constant 0 : index
    %142 = vector.load %arg4[%c9, %c0_78, %c0_79] : memref<18x128x128xbf16, #tpu.memory_space<vmem>>, vector<1x128x128xbf16>
    %143 = vector.shape_cast %142 : vector<1x128x128xbf16> to vector<128x128xbf16>
    %c10 = arith.constant 10 : index
    %c0_80 = arith.constant 0 : index
    %c0_81 = arith.constant 0 : index
    %144 = vector.load %arg4[%c10, %c0_80, %c0_81] : memref<18x128x128xbf16, #tpu.memory_space<vmem>>, vector<1x128x128xbf16>
    %145 = vector.shape_cast %144 : vector<1x128x128xbf16> to vector<128x128xbf16>
    %c11 = arith.constant 11 : index
    %c0_82 = arith.constant 0 : index
    %c0_83 = arith.constant 0 : index
    %146 = vector.load %arg4[%c11, %c0_82, %c0_83] : memref<18x128x128xbf16, #tpu.memory_space<vmem>>, vector<1x128x128xbf16>
    %147 = vector.shape_cast %146 : vector<1x128x128xbf16> to vector<128x128xbf16>
    %c3_84 = arith.constant 3 : index
    %c0_85 = arith.constant 0 : index
    %c0_86 = arith.constant 0 : index
    %148 = vector.load %arg5[%c3_84, %c0_85, %c0_86] : memref<6x1x128xf32, #tpu.memory_space<vmem>>, vector<1x1x128xf32>
    %149 = vector.shape_cast %148 : vector<1x1x128xf32> to vector<1x128xf32>
    %cst_87 = arith.constant dense<0.000000e+00> : vector<16x128xf32>
    %150 = tpu.matmul %141, %143, %cst_87 {dimension_numbers = #tpu.dot_dimension_numbers<[1], [0], [0], [1], [0, 0, 1, 1], [], []>} : vector<16x128xbf16>, vector<128x128xbf16>, vector<16x128xf32> -> vector<16x128xf32>
    %cst_88 = arith.constant dense<0.000000e+00> : vector<16x128xf32>
    %151 = tpu.matmul %141, %145, %cst_88 {dimension_numbers = #tpu.dot_dimension_numbers<[1], [0], [0], [1], [0, 0, 1, 1], [], []>} : vector<16x128xbf16>, vector<128x128xbf16>, vector<16x128xf32> -> vector<16x128xf32>
    %cst_89 = arith.constant dense<0.000000e+00> : vector<16x128xf32>
    %152 = tpu.matmul %141, %147, %cst_89 {dimension_numbers = #tpu.dot_dimension_numbers<[1], [0], [0], [1], [0, 0, 1, 1], [], []>} : vector<16x128xbf16>, vector<128x128xbf16>, vector<16x128xf32> -> vector<16x128xf32>
    %c1_i32_90 = arith.constant 1 : i32
    %153 = tpu.dynamic_rotate %150 by %c1_i32_90 dim 0 : vector<16x128xf32>, i32 -> vector<16x128xf32>
    %154 = arith.select %38, %153, %41 : vector<16x128xi1>, vector<16x128xf32>
    %155 = arith.addf %154, %151 : vector<16x128xf32>
    %156 = vector.broadcast %149 : vector<1x128xf32> to vector<16x128xf32>
    %157 = arith.addf %155, %156 : vector<16x128xf32>
    %c15_i32_91 = arith.constant 15 : i32
    %158 = tpu.dynamic_rotate %152 by %c15_i32_91 dim 0 : vector<16x128xf32>, i32 -> vector<16x128xf32>
    %159 = arith.select %40, %158, %41 : vector<16x128xi1>, vector<16x128xf32>
    %160 = arith.addf %157, %159 : vector<16x128xf32>
    %cst_92 = arith.constant 0.000000e+00 : f32
    %161 = vector.broadcast %cst_92 : f32 to vector<16x128xf32>
    %162 = arith.cmpf ogt, %160, %161 : vector<16x128xf32>
    %cst_93 = arith.constant 0.00999999977 : f32
    %163 = vector.broadcast %cst_93 : f32 to vector<16x128xf32>
    %164 = arith.mulf %163, %160 : vector<16x128xf32>
    %165 = arith.select %162, %160, %164 : vector<16x128xi1>, vector<16x128xf32>
    %166 = arith.truncf %165 : vector<16x128xf32> to vector<16x128xbf16>
    %c12 = arith.constant 12 : index
    %c0_94 = arith.constant 0 : index
    %c0_95 = arith.constant 0 : index
    %167 = vector.load %arg4[%c12, %c0_94, %c0_95] : memref<18x128x128xbf16, #tpu.memory_space<vmem>>, vector<1x128x128xbf16>
    %168 = vector.shape_cast %167 : vector<1x128x128xbf16> to vector<128x128xbf16>
    %c13 = arith.constant 13 : index
    %c0_96 = arith.constant 0 : index
    %c0_97 = arith.constant 0 : index
    %169 = vector.load %arg4[%c13, %c0_96, %c0_97] : memref<18x128x128xbf16, #tpu.memory_space<vmem>>, vector<1x128x128xbf16>
    %170 = vector.shape_cast %169 : vector<1x128x128xbf16> to vector<128x128xbf16>
    %c14 = arith.constant 14 : index
    %c0_98 = arith.constant 0 : index
    %c0_99 = arith.constant 0 : index
    %171 = vector.load %arg4[%c14, %c0_98, %c0_99] : memref<18x128x128xbf16, #tpu.memory_space<vmem>>, vector<1x128x128xbf16>
    %172 = vector.shape_cast %171 : vector<1x128x128xbf16> to vector<128x128xbf16>
    %c4_100 = arith.constant 4 : index
    %c0_101 = arith.constant 0 : index
    %c0_102 = arith.constant 0 : index
    %173 = vector.load %arg5[%c4_100, %c0_101, %c0_102] : memref<6x1x128xf32, #tpu.memory_space<vmem>>, vector<1x1x128xf32>
    %174 = vector.shape_cast %173 : vector<1x1x128xf32> to vector<1x128xf32>
    %cst_103 = arith.constant dense<0.000000e+00> : vector<16x128xf32>
    %175 = tpu.matmul %166, %168, %cst_103 {dimension_numbers = #tpu.dot_dimension_numbers<[1], [0], [0], [1], [0, 0, 1, 1], [], []>} : vector<16x128xbf16>, vector<128x128xbf16>, vector<16x128xf32> -> vector<16x128xf32>
    %cst_104 = arith.constant dense<0.000000e+00> : vector<16x128xf32>
    %176 = tpu.matmul %166, %170, %cst_104 {dimension_numbers = #tpu.dot_dimension_numbers<[1], [0], [0], [1], [0, 0, 1, 1], [], []>} : vector<16x128xbf16>, vector<128x128xbf16>, vector<16x128xf32> -> vector<16x128xf32>
    %cst_105 = arith.constant dense<0.000000e+00> : vector<16x128xf32>
    %177 = tpu.matmul %166, %172, %cst_105 {dimension_numbers = #tpu.dot_dimension_numbers<[1], [0], [0], [1], [0, 0, 1, 1], [], []>} : vector<16x128xbf16>, vector<128x128xbf16>, vector<16x128xf32> -> vector<16x128xf32>
    %c1_i32_106 = arith.constant 1 : i32
    %178 = tpu.dynamic_rotate %175 by %c1_i32_106 dim 0 : vector<16x128xf32>, i32 -> vector<16x128xf32>
    %179 = arith.select %38, %178, %41 : vector<16x128xi1>, vector<16x128xf32>
    %180 = arith.addf %179, %176 : vector<16x128xf32>
    %181 = vector.broadcast %174 : vector<1x128xf32> to vector<16x128xf32>
    %182 = arith.addf %180, %181 : vector<16x128xf32>
    %c15_i32_107 = arith.constant 15 : i32
    %183 = tpu.dynamic_rotate %177 by %c15_i32_107 dim 0 : vector<16x128xf32>, i32 -> vector<16x128xf32>
    %184 = arith.select %40, %183, %41 : vector<16x128xi1>, vector<16x128xf32>
    %185 = arith.addf %182, %184 : vector<16x128xf32>
    %cst_108 = arith.constant 0.000000e+00 : f32
    %186 = vector.broadcast %cst_108 : f32 to vector<16x128xf32>
    %187 = arith.cmpf ogt, %185, %186 : vector<16x128xf32>
    %cst_109 = arith.constant 0.00999999977 : f32
    %188 = vector.broadcast %cst_109 : f32 to vector<16x128xf32>
    %189 = arith.mulf %188, %185 : vector<16x128xf32>
    %190 = arith.select %187, %185, %189 : vector<16x128xi1>, vector<16x128xf32>
    %191 = arith.truncf %190 : vector<16x128xf32> to vector<16x128xbf16>
    %c15 = arith.constant 15 : index
    %c0_110 = arith.constant 0 : index
    %c0_111 = arith.constant 0 : index
    %192 = vector.load %arg4[%c15, %c0_110, %c0_111] : memref<18x128x128xbf16, #tpu.memory_space<vmem>>, vector<1x128x128xbf16>
    %193 = vector.shape_cast %192 : vector<1x128x128xbf16> to vector<128x128xbf16>
    %c16 = arith.constant 16 : index
    %c0_112 = arith.constant 0 : index
    %c0_113 = arith.constant 0 : index
    %194 = vector.load %arg4[%c16, %c0_112, %c0_113] : memref<18x128x128xbf16, #tpu.memory_space<vmem>>, vector<1x128x128xbf16>
    %195 = vector.shape_cast %194 : vector<1x128x128xbf16> to vector<128x128xbf16>
    %c17 = arith.constant 17 : index
    %c0_114 = arith.constant 0 : index
    %c0_115 = arith.constant 0 : index
    %196 = vector.load %arg4[%c17, %c0_114, %c0_115] : memref<18x128x128xbf16, #tpu.memory_space<vmem>>, vector<1x128x128xbf16>
    %197 = vector.shape_cast %196 : vector<1x128x128xbf16> to vector<128x128xbf16>
    %c5_116 = arith.constant 5 : index
    %c0_117 = arith.constant 0 : index
    %c0_118 = arith.constant 0 : index
    %198 = vector.load %arg5[%c5_116, %c0_117, %c0_118] : memref<6x1x128xf32, #tpu.memory_space<vmem>>, vector<1x1x128xf32>
    %199 = vector.shape_cast %198 : vector<1x1x128xf32> to vector<1x128xf32>
    %cst_119 = arith.constant dense<0.000000e+00> : vector<16x128xf32>
    %200 = tpu.matmul %191, %193, %cst_119 {dimension_numbers = #tpu.dot_dimension_numbers<[1], [0], [0], [1], [0, 0, 1, 1], [], []>} : vector<16x128xbf16>, vector<128x128xbf16>, vector<16x128xf32> -> vector<16x128xf32>
    %cst_120 = arith.constant dense<0.000000e+00> : vector<16x128xf32>
    %201 = tpu.matmul %191, %195, %cst_120 {dimension_numbers = #tpu.dot_dimension_numbers<[1], [0], [0], [1], [0, 0, 1, 1], [], []>} : vector<16x128xbf16>, vector<128x128xbf16>, vector<16x128xf32> -> vector<16x128xf32>
    %cst_121 = arith.constant dense<0.000000e+00> : vector<16x128xf32>
    %202 = tpu.matmul %191, %197, %cst_121 {dimension_numbers = #tpu.dot_dimension_numbers<[1], [0], [0], [1], [0, 0, 1, 1], [], []>} : vector<16x128xbf16>, vector<128x128xbf16>, vector<16x128xf32> -> vector<16x128xf32>
    %c1_i32_122 = arith.constant 1 : i32
    %203 = tpu.dynamic_rotate %200 by %c1_i32_122 dim 0 : vector<16x128xf32>, i32 -> vector<16x128xf32>
    %204 = arith.select %38, %203, %41 : vector<16x128xi1>, vector<16x128xf32>
    %205 = arith.addf %204, %201 : vector<16x128xf32>
    %206 = vector.broadcast %199 : vector<1x128xf32> to vector<16x128xf32>
    %207 = arith.addf %205, %206 : vector<16x128xf32>
    %c15_i32_123 = arith.constant 15 : i32
    %208 = tpu.dynamic_rotate %202 by %c15_i32_123 dim 0 : vector<16x128xf32>, i32 -> vector<16x128xf32>
    %209 = arith.select %40, %208, %41 : vector<16x128xi1>, vector<16x128xf32>
    %210 = arith.addf %207, %209 : vector<16x128xf32>
    %cst_124 = arith.constant 0.000000e+00 : f32
    %211 = vector.broadcast %cst_124 : f32 to vector<16x128xf32>
    %212 = arith.cmpf ogt, %210, %211 : vector<16x128xf32>
    %cst_125 = arith.constant 0.00999999977 : f32
    %213 = vector.broadcast %cst_125 : f32 to vector<16x128xf32>
    %214 = arith.mulf %213, %210 : vector<16x128xf32>
    %215 = arith.select %212, %210, %214 : vector<16x128xi1>, vector<16x128xf32>
    %c0_126 = arith.constant 0 : index
    %c0_127 = arith.constant 0 : index
    %216 = vector.load %arg6[%c0_126, %c0_127] : memref<3x128xf32, #tpu.memory_space<vmem>>, vector<3x128xf32>
    %c1_i32_128 = arith.constant 1 : i32
    %217 = tpu.dynamic_rotate %215 by %c1_i32_128 dim 0 : vector<16x128xf32>, i32 -> vector<16x128xf32>
    %218 = arith.select %38, %217, %41 : vector<16x128xi1>, vector<16x128xf32>
    %c15_i32_129 = arith.constant 15 : i32
    %219 = tpu.dynamic_rotate %215 by %c15_i32_129 dim 0 : vector<16x128xf32>, i32 -> vector<16x128xf32>
    %220 = arith.select %40, %219, %41 : vector<16x128xi1>, vector<16x128xf32>
    %221 = vector.extract_strided_slice %216 {offsets = [0, 0], sizes = [1, 128], strides = [1, 1]} : vector<3x128xf32> to vector<1x128xf32>
    %222 = vector.shape_cast %221 : vector<1x128xf32> to vector<128xf32>
    %223 = vector.shape_cast %222 : vector<128xf32> to vector<1x128xf32>
    %224 = vector.broadcast %223 : vector<1x128xf32> to vector<16x128xf32>
    %225 = arith.mulf %218, %224 : vector<16x128xf32>
    %226 = vector.extract_strided_slice %216 {offsets = [1, 0], sizes = [1, 128], strides = [1, 1]} : vector<3x128xf32> to vector<1x128xf32>
    %227 = vector.shape_cast %226 : vector<1x128xf32> to vector<128xf32>
    %228 = vector.shape_cast %227 : vector<128xf32> to vector<1x128xf32>
    %229 = vector.broadcast %228 : vector<1x128xf32> to vector<16x128xf32>
    %230 = arith.mulf %215, %229 : vector<16x128xf32>
    %231 = arith.addf %225, %230 : vector<16x128xf32>
    %232 = vector.extract_strided_slice %216 {offsets = [2, 0], sizes = [1, 128], strides = [1, 1]} : vector<3x128xf32> to vector<1x128xf32>
    %233 = vector.shape_cast %232 : vector<1x128xf32> to vector<128xf32>
    %234 = vector.shape_cast %233 : vector<128xf32> to vector<1x128xf32>
    %235 = vector.broadcast %234 : vector<1x128xf32> to vector<16x128xf32>
    %236 = arith.mulf %220, %235 : vector<16x128xf32>
    %237 = arith.addf %231, %236 : vector<16x128xf32>
    %cst_130 = arith.constant dense<0.000000e+00> : vector<16xf32>
    %238 = vector.multi_reduction <add>, %237, %cst_130 [1] : vector<16x128xf32> to vector<16xf32>
    %239 = vector.shape_cast %238 : vector<16xf32> to vector<16x1xf32>
    %c0_131 = arith.constant 0 : index
    %240 = memref.load %arg7[%c0_131] : memref<3xf32, #tpu.memory_space<smem>>
    %c1_132 = arith.constant 1 : index
    %241 = memref.load %arg7[%c1_132] : memref<3xf32, #tpu.memory_space<smem>>
    %c2_133 = arith.constant 2 : index
    %242 = memref.load %arg7[%c2_133] : memref<3xf32, #tpu.memory_space<smem>>
    %243 = vector.broadcast %240 : f32 to vector<16x1xf32>
    %244 = arith.addf %239, %243 : vector<16x1xf32>
    %245 = vector.broadcast %241 : f32 to vector<16x1xf32>
    %246 = arith.mulf %244, %245 : vector<16x1xf32>
    %247 = vector.broadcast %242 : f32 to vector<16x1xf32>
    %248 = arith.addf %246, %247 : vector<16x1xf32>
    %c0_134 = arith.constant 0 : index
    %c0_135 = arith.constant 0 : index
    %249 = vector.load %arg8[%c0_134, %c0_135] : memref<16x1xf32, #tpu.memory_space<vmem>>, vector<16x1xf32>
    tpu.vector_store %arg8[%c0_134, %c0_135], %248 {strides = array<i32>} : memref<16x1xf32, #tpu.memory_space<vmem>>, vector<16x1xf32>,
    return
  }
  func.func @transform_0(%arg0: i32) -> (i32, i32) {
    %c0_i32 = arith.constant 0 : i32
    %c0_i32_0 = arith.constant 0 : i32
    return %arg0, %c0_i32 : i32, i32
  }
  func.func @transform_1(%arg0: i32) -> (i32, i32, i32) {
    %c0_i32 = arith.constant 0 : i32
    %c0_i32_0 = arith.constant 0 : i32
    %c0_i32_1 = arith.constant 0 : i32
    %c0_i32_2 = arith.constant 0 : i32
    return %c0_i32, %c0_i32_0, %c0_i32_1 : i32, i32, i32
  }
  func.func @transform_2(%arg0: i32) -> (i32, i32) {
    %c0_i32 = arith.constant 0 : i32
    %c0_i32_0 = arith.constant 0 : i32
    %c0_i32_1 = arith.constant 0 : i32
    return %c0_i32, %c0_i32_0 : i32, i32
  }
  func.func @transform_3(%arg0: i32) -> (i32, i32, i32) {
    %c0_i32 = arith.constant 0 : i32
    %c0_i32_0 = arith.constant 0 : i32
    %c0_i32_1 = arith.constant 0 : i32
    %c0_i32_2 = arith.constant 0 : i32
    return %c0_i32, %c0_i32_0, %c0_i32_1 : i32, i32, i32
  }
  func.func @transform_4(%arg0: i32) -> (i32, i32, i32) {
    %c0_i32 = arith.constant 0 : i32
    %c0_i32_0 = arith.constant 0 : i32
    %c0_i32_1 = arith.constant 0 : i32
    %c0_i32_2 = arith.constant 0 : i32
    return %c0_i32, %c0_i32_0, %c0_i32_1 : i32, i32, i32
  }
  func.func @transform_5(%arg0: i32) -> (i32, i32) {
    %c0_i32 = arith.constant 0 : i32
    %c0_i32_0 = arith.constant 0 : i32
    %c0_i32_1 = arith.constant 0 : i32
    return %c0_i32, %c0_i32_0 : i32, i32
  }
  func.func @transform_6(%arg0: i32) -> i32 {
    %c0_i32 = arith.constant 0 : i32
    %c0_i32_0 = arith.constant 0 : i32
    return %c0_i32 : i32
  }
  func.func @transform_7(%arg0: i32) -> (i32, i32) {
    %c0_i32 = arith.constant 0 : i32
    %c0_i32_0 = arith.constant 0 : i32
    return %arg0, %c0_i32 : i32, i32
  }
}

</mosaic_0001>

<llo_original>
// kernel: tpu_custom_call.1
$region0: #{tpu_custom_call.1}
  #allocation0 [shape = 'u32[]', space=smem, size = 0x4, offset = 0x4, fixed_abs, tag = 'smem constant byte address 0x4 - core index']
  #allocation1 [shape = 'u32[72,128]{1,0:T(1,128)}', space=vmem, size = 0x9000, scoped, tag = 'internal scratch']
  %s0 = inlined_call_operand.hbm [shape: bf16[32,64], index: 0, kind: input, shape index: {}]
  %s1 = inlined_call_operand.hbm [shape: bf16[3,64,128], index: 1, kind: input, shape index: {}]
  %s2 = inlined_call_operand.hbm [shape: f32[1,128], index: 2, kind: input, shape index: {}]
  %s3 = inlined_call_operand.hbm [shape: bf16[18,128,128], index: 3, kind: input, shape index: {}]
  %s4 = inlined_call_operand.hbm [shape: f32[6,1,128], index: 4, kind: input, shape index: {}]
  %s5 = inlined_call_operand.vmem [shape: f32[3,128], index: 5, kind: input, shape index: {}]
  %s6 = inlined_call_operand.vmem [shape: f32[3], index: 6, kind: input, shape index: {}]
  %s7 = inlined_call_operand.vmem [shape: f32[32,1], index: 7, kind: output, shape index: {}]
  %s8 = sld [smem:[#allocation0]]
  $region85: #{tpu_custom_call.1} parent=0
    _
  %s10 = ssub.s32 1, %s8
  %s11 = scalar_select 0, %s10, %s8
  $region1: #{tpu_custom_call.1} parent=0
    #allocation2 [shape = 'u8[8192]{0}', space=vmem, size = 0x2000, scoped, tag = 'input window, operand 0']
    #allocation3 [shape = 's32[2]{0}', space=sflag, size = 0x8, scoped, tag = 'scoped memory for tpu_custom_call.1']
    #allocation4 [shape = 's32[2]{0}', space=sflag, size = 0x8, scoped, tag = 'scoped memory for tpu_custom_call.1']
    #allocation5 [shape = 'u8[49152]{0}', space=vmem, size = 0xc000, scoped, tag = 'input window, operand 1, single buffered']
    #allocation6 [shape = 's32[1]{0}', space=sflag, size = 0x4, scoped, tag = 'scoped memory for tpu_custom_call.1']
    #allocation7 [shape = 'u8[512]{0}', space=vmem, size = 0x400, scoped, tag = 'input window, operand 2, single buffered']
    #allocation8 [shape = 'u8[589824]{0}', space=vmem, size = 0x90000, scoped, tag = 'input window, operand 3, single buffered']
    #allocation9 [shape = 's32[1]{0}', space=sflag, size = 0x4, scoped, tag = 'scoped memory for tpu_custom_call.1']
    #allocation10 [shape = 'u8[3072]{0}', space=vmem, size = 0xc00, scoped, tag = 'input window, operand 4, single buffered']
    #allocation11 [shape = 'u8[512]{0}', space=smem, size = 0x200, scoped, tag = 'input window, operand 6, single buffered']
    %12 = vsyncpa [#allocation3], 0
    %s13 = scalar_lea.sflag [#allocation3], 1
    %14 = vsyncpa %s13, 0
    %15 = vsyncpa [#allocation6], 0
    %16 = vsyncpa [#allocation9], 0
    %17 = vsyncpa [#allocation4], 0
    loop: start=0, step=1, limit=4
    $region2: #{tpu_custom_call.1} parent=1 // loop_pre_header
      _
    $region3: #{tpu_custom_call.1} parent=1 // loop_header
      %s19 = sphi 0, %s23
      %p20 = scmp.ge.s32.totalorder %s19, 4
      %s29 = sphi 0, %s31
      %s32 = sphi 0, %s29
      %s33 = sphi 0, %s32
      %s49 = sphi 0, %s33
      %s53 = sphi 0, %s53
      %s55 = sphi 0, %s53
      %s56 = sphi 0, %s55
      %s70 = sphi 0, %s56
      %s74 = sphi 0, %s74
      %s76 = sphi 0, %s74
      %s77 = sphi 0, %s76
      %s91 = sphi 0, %s77
      %s95 = sphi 0, %s95
      %s97 = sphi 0, %s95
      %s98 = sphi 0, %s97
      %s112 = sphi 0, %s98
      %s116 = sphi 0, %s116
      %s118 = sphi 0, %s116
      %s119 = sphi 0, %s118
      %s133 = sphi 0, %s119
      %s137 = sphi 0, %s137
      %s139 = sphi 0, %s137
      %s140 = sphi 0, %s139
      %s154 = sphi 0, %s140
      %s158 = sphi 0, %s158
      %s160 = sphi 0, %s158
      %s161 = sphi 0, %s160
      %s175 = sphi 0, %s161
      %s181 = sphi 0, %s183
      %s184 = sphi 0, %s181
      %s185 = sphi 0, %s184
      %s201 = sphi 0, %s185
    $region4: #{tpu_custom_call.1} parent=1 // loop_header_branch
      %22 = sbr.rel (%p20) target = $region8
    $region5: #{tpu_custom_call.1} parent=1 // loop_body
      %s24 = ssub.s32 %s19, 1
      %s25 = ssub.s32 %s19, 2
      %s26 = sadd.s32 %s19, 1
      %s27 = ssub.s32 %s19, %s26
      %p28 = scmp.eq.s32.totalorder %s27, 0
      %s30 = sadd.s32 %s29, 1
      %s31 = scalar_select %p28, %s29, %s30
      %p34 = pneg %p28
      %p35 = scmp.eq.s32.totalorder %s19, 1
      %p36 = por %p34, %p35
      %p37 = scmp.ne.s32.totalorder %s29, %s32
      %p38 = scmp.eq.s32.totalorder %s19, 0
      %p39 = por %p37, %p38
      %p40 = scmp.ne.s32.totalorder %s29, %s32
      %p41 = scmp.eq.s32.totalorder %s24, 1
      %p42 = por %p40, %p41
      %p43 = scmp.ne.s32.totalorder %s32, %s33
      %p44 = scmp.eq.s32.totalorder %s24, 0
      %p45 = por %p43, %p44
      %p46 = scmp.ne.s32.totalorder %s32, %s33
      %p47 = scmp.eq.s32.totalorder %s25, 1
      %p48 = por %p46, %p47
      %p50 = scmp.ne.s32.totalorder %s33, %s49
      %p51 = scmp.eq.s32.totalorder %s25, 0
      %p52 = por %p50, %p51
      %s54 = sadd.s32 %s53, 1
      %p57 = scmp.eq.s32.totalorder %s19, 1
      %p58 = scmp.ne.s32.totalorder %s53, %s55
      %p59 = scmp.eq.s32.totalorder %s19, 0
      %p60 = por %p58, %p59
      %p61 = scmp.ne.s32.totalorder %s53, %s55
      %p62 = scmp.eq.s32.totalorder %s24, 1
      %p63 = por %p61, %p62
      %p64 = scmp.ne.s32.totalorder %s55, %s56
      %p65 = scmp.eq.s32.totalorder %s24, 0
      %p66 = por %p64, %p65
      %p67 = scmp.ne.s32.totalorder %s55, %s56
      %p68 = scmp.eq.s32.totalorder %s25, 1
      %p69 = por %p67, %p68
      %p71 = scmp.ne.s32.totalorder %s56, %s70
      %p72 = scmp.eq.s32.totalorder %s25, 0
      %p73 = por %p71, %p72
      %s75 = sadd.s32 %s74, 1
      %p78 = scmp.eq.s32.totalorder %s19, 1
      %p79 = scmp.ne.s32.totalorder %s74, %s76
      %p80 = scmp.eq.s32.totalorder %s19, 0
      %p81 = por %p79, %p80
      %p82 = scmp.ne.s32.totalorder %s74, %s76
      %p83 = scmp.eq.s32.totalorder %s24, 1
      %p84 = por %p82, %p83
      %p85 = scmp.ne.s32.totalorder %s76, %s77
      %p86 = scmp.eq.s32.totalorder %s24, 0
      %p87 = por %p85, %p86
      %p88 = scmp.ne.s32.totalorder %s76, %s77
      %p89 = scmp.eq.s32.totalorder %s25, 1
      %p90 = por %p88, %p89
      %p92 = scmp.ne.s32.totalorder %s77, %s91
      %p93 = scmp.eq.s32.totalorder %s25, 0
      %p94 = por %p92, %p93
      %s96 = sadd.s32 %s95, 1
      %p99 = scmp.eq.s32.totalorder %s19, 1
      %p100 = scmp.ne.s32.totalorder %s95, %s97
      %p101 = scmp.eq.s32.totalorder %s19, 0
      %p102 = por %p100, %p101
      %p103 = scmp.ne.s32.totalorder %s95, %s97
      %p104 = scmp.eq.s32.totalorder %s24, 1
      %p105 = por %p103, %p104
      %p106 = scmp.ne.s32.totalorder %s97, %s98
      %p107 = scmp.eq.s32.totalorder %s24, 0
      %p108 = por %p106, %p107
      %p109 = scmp.ne.s32.totalorder %s97, %s98
      %p110 = scmp.eq.s32.totalorder %s25, 1
      %p111 = por %p109, %p110
      %p113 = scmp.ne.s32.totalorder %s98, %s112
      %p114 = scmp.eq.s32.totalorder %s25, 0
      %p115 = por %p113, %p114
      %s117 = sadd.s32 %s116, 1
      %p120 = scmp.eq.s32.totalorder %s19, 1
      %p121 = scmp.ne.s32.totalorder %s116, %s118
      %p122 = scmp.eq.s32.totalorder %s19, 0
      %p123 = por %p121, %p122
      %p124 = scmp.ne.s32.totalorder %s116, %s118
      %p125 = scmp.eq.s32.totalorder %s24, 1
      %p126 = por %p124, %p125
      %p127 = scmp.ne.s32.totalorder %s118, %s119
      %p128 = scmp.eq.s32.totalorder %s24, 0
      %p129 = por %p127, %p128
      %p130 = scmp.ne.s32.totalorder %s118, %s119
      %p131 = scmp.eq.s32.totalorder %s25, 1
      %p132 = por %p130, %p131
      %p134 = scmp.ne.s32.totalorder %s119, %s133
      %p135 = scmp.eq.s32.totalorder %s25, 0
      %p136 = por %p134, %p135
      %s138 = sadd.s32 %s137, 1
      %p141 = scmp.eq.s32.totalorder %s19, 1
      %p142 = scmp.ne.s32.totalorder %s137, %s139
      %p143 = scmp.eq.s32.totalorder %s19, 0
      %p144 = por %p142, %p143
      %p145 = scmp.ne.s32.totalorder %s137, %s139
      %p146 = scmp.eq.s32.totalorder %s24, 1
      %p147 = por %p145, %p146
      %p148 = scmp.ne.s32.totalorder %s139, %s140
      %p149 = scmp.eq.s32.totalorder %s24, 0
      %p150 = por %p148, %p149
      %p151 = scmp.ne.s32.totalorder %s139, %s140
      %p152 = scmp.eq.s32.totalorder %s25, 1
      %p153 = por %p151, %p152
      %p155 = scmp.ne.s32.totalorder %s140, %s154
      %p156 = scmp.eq.s32.totalorder %s25, 0
      %p157 = por %p155, %p156
      %s159 = sadd.s32 %s158, 1
      %p162 = scmp.eq.s32.totalorder %s19, 1
      %p163 = scmp.ne.s32.totalorder %s158, %s160
      %p164 = scmp.eq.s32.totalorder %s19, 0
      %p165 = por %p163, %p164
      %p166 = scmp.ne.s32.totalorder %s158, %s160
      %p167 = scmp.eq.s32.totalorder %s24, 1
      %p168 = por %p166, %p167
      %p169 = scmp.ne.s32.totalorder %s160, %s161
      %p170 = scmp.eq.s32.totalorder %s24, 0
      %p171 = por %p169, %p170
      %p172 = scmp.ne.s32.totalorder %s160, %s161
      %p173 = scmp.eq.s32.totalorder %s25, 1
      %p174 = por %p172, %p173
      %p176 = scmp.ne.s32.totalorder %s161, %s175
      %p177 = scmp.eq.s32.totalorder %s25, 0
      %p178 = por %p176, %p177
      %s179 = ssub.s32 %s19, %s26
      %p180 = scmp.eq.s32.totalorder %s179, 0
      %s182 = sadd.s32 %s181, 1
      %s183 = scalar_select %p180, %s181, %s182
      %p186 = pneg %p180
      %p187 = scmp.eq.s32.totalorder %s19, 1
      %p188 = por %p186, %p187
      %p189 = scmp.ne.s32.totalorder %s181, %s184
      %p190 = scmp.eq.s32.totalorder %s19, 0
      %p191 = por %p189, %p190
      %p192 = scmp.ne.s32.totalorder %s181, %s184
      %p193 = scmp.eq.s32.totalorder %s24, 1
      %p194 = por %p192, %p193
      %p195 = scmp.ne.s32.totalorder %s184, %s185
      %p196 = scmp.eq.s32.totalorder %s24, 0
      %p197 = por %p195, %p196
      %p198 = scmp.ne.s32.totalorder %s184, %s185
      %p199 = scmp.eq.s32.totalorder %s25, 1
      %p200 = por %p198, %p199
      %p202 = scmp.ne.s32.totalorder %s185, %s201
      %p203 = scmp.eq.s32.totalorder %s25, 0
      %p204 = por %p202, %p203
      %p205 = scmp.le.s32.totalorder 1, %s19
      %p206 = scmp.lt.s32.totalorder %s19, 3
      %p207 = pnand %p205, %p206
      %p208 = pneg %p207
      // Predicated region
      $region9: #{tpu_custom_call.1} parent=5 // pred_check
        _
      $region10: #{tpu_custom_call.1} parent=5 // pred_check_branch
        %210 = sbr.rel (%p207) target = $region12
      $region11: #{tpu_custom_call.1} parent=5 // pred_region
        %s211 = ssub.s32 %s19, 1
        // Predicated region
        $region13: #{tpu_custom_call.1} parent=11 // pred_check
          %p212 = pneg %p66
        $region14: #{tpu_custom_call.1} parent=11 // pred_check_branch
          %214 = sbr.rel (%p212) target = $region16
        $region15: #{tpu_custom_call.1} parent=11 // pred_region
          %216 = vsyncadd [#allocation6], 0
          %s217 = sshll.u32 %s1, 4
          %s218 = int_to_ptr.hbm [resolvable:$true] %s217
          %s219 = sshll.u32 [#allocation5], 4
          %s220 = int_to_ptr.vmem [resolvable:$true] %s219
          %225 = dma.hbm_to_vmem [thread:$0]  %s218, 1536, %s220, [#allocation6], 64, 64, 4
        $region16: #{tpu_custom_call.1} parent=11 // pred_fallthru
          _
        // Predicated region
        $region17: #{tpu_custom_call.1} parent=11 // pred_check
          %p226 = pneg %p87
        $region18: #{tpu_custom_call.1} parent=11 // pred_check_branch
          %228 = sbr.rel (%p226) target = $region20
        $region19: #{tpu_custom_call.1} parent=11 // pred_region
          %230 = vsyncadd [#allocation6], 0
          %s232 = sshll.u32 %s2, 4
          %s233 = int_to_ptr.hbm [resolvable:$true] %s232
          %s234 = sshll.u32 [#allocation7], 4
          %s235 = int_to_ptr.vmem [resolvable:$true] %s234
          %237 = dma.hbm_to_vmem [thread:$0]  %s233, 16, %s235, [#allocation6]
        $region20: #{tpu_custom_call.1} parent=11 // pred_fallthru
          _
        // Predicated region
        $region21: #{tpu_custom_call.1} parent=11 // pred_check
          %p238 = pneg %p108
        $region22: #{tpu_custom_call.1} parent=11 // pred_check_branch
          %240 = sbr.rel (%p238) target = $region24
        $region23: #{tpu_custom_call.1} parent=11 // pred_region
          %242 = vsyncadd [#allocation9], 0
          %s243 = sshll.u32 %s3, 4
          %s244 = int_to_ptr.hbm [resolvable:$true] %s243
          %s245 = sshll.u32 [#allocation8], 4
          %s246 = int_to_ptr.vmem [resolvable:$true] %s245
          %251 = dma.hbm_to_vmem [thread:$0]  %s244, 18432, %s246, [#allocation9], 64, 64, 4
        $region24: #{tpu_custom_call.1} parent=11 // pred_fallthru
          _
        // Predicated region
        $region25: #{tpu_custom_call.1} parent=11 // pred_check
          %p252 = pneg %p129
        $region26: #{tpu_custom_call.1} parent=11 // pred_check_branch
          %254 = sbr.rel (%p252) target = $region28
        $region27: #{tpu_custom_call.1} parent=11 // pred_region
          %256 = vsyncadd [#allocation9], 0
          %s257 = sshll.u32 %s4, 4
          %s258 = int_to_ptr.hbm [resolvable:$true] %s257
          %s259 = sshll.u32 [#allocation10], 4
          %s260 = int_to_ptr.vmem [resolvable:$true] %s259
          %265 = dma.hbm_to_vmem [thread:$0]  %s258, 96, %s260, [#allocation9], 16, 16, 1
        $region28: #{tpu_custom_call.1} parent=11 // pred_fallthru
          _
        // Predicated region
        $region29: #{tpu_custom_call.1} parent=11 // pred_check
          %p266 = pneg %p150
        $region30: #{tpu_custom_call.1} parent=11 // pred_check_branch
          %268 = sbr.rel (%p266) target = $region32
        $region31: #{tpu_custom_call.1} parent=11 // pred_region
          _
        $region32: #{tpu_custom_call.1} parent=11 // pred_fallthru
          _
        // Predicated region
        $region33: #{tpu_custom_call.1} parent=11 // pred_check
          %p269 = pneg %p171
        $region34: #{tpu_custom_call.1} parent=11 // pred_check_branch
          %271 = sbr.rel (%p269) target = $region36
        $region35: #{tpu_custom_call.1} parent=11 // pred_region
          %273 = vsyncadd [#allocation4], 0
          %s275 = sshll.u32 %s6, 4
          %s276 = int_to_ptr.vmem [resolvable:$true] %s275
          %278 = dma.vmem_to_smem %s276, 16, [#allocation11], [#allocation4]
        $region36: #{tpu_custom_call.1} parent=11 // pred_fallthru
          _
      $region12: #{tpu_custom_call.1} parent=5 // pred_fallthru
        _
      %p279 = scmp.lt.s32.totalorder %s19, 2
      // Predicated region
      $region37: #{tpu_custom_call.1} parent=5 // pred_check
        %p280 = pneg %p279
      $region38: #{tpu_custom_call.1} parent=5 // pred_check_branch
        %282 = sbr.rel (%p280) target = $region40
      $region39: #{tpu_custom_call.1} parent=5 // pred_region
        // Predicated region
        $region41: #{tpu_custom_call.1} parent=39 // pred_check
          %p283 = pneg %p39
        $region42: #{tpu_custom_call.1} parent=39 // pred_check_branch
          %285 = sbr.rel (%p283) target = $region44
        $region43: #{tpu_custom_call.1} parent=39 // pred_region
          %s286 = sand.u32 %s29, 1
          %s287 = scalar_lea.sflag [#allocation3], %s286
          %s288 = sand.u32 %s29, 1
          %s289 = smul.addr %s288, 8
          %s290 = scalar_lea.vmem [#allocation2], %s289
          %s291 = smul.u32 2, %s19
          %293 = vsyncadd %s287, 0
          %s294 = smul.addr %s291, 4
          %s295 = scalar_lea.hbm %s0, %s294
          %s296 = sshll.u32 %s295, 4
          %s297 = int_to_ptr.hbm [resolvable:$true] %s296
          %s298 = sshll.u32 %s290, 4
          %s299 = int_to_ptr.vmem [resolvable:$true] %s298
          %304 = dma.hbm_to_vmem [thread:$0]  %s297, 128, %s299, %s287, 64, 64, 4
        $region44: #{tpu_custom_call.1} parent=39 // pred_fallthru
          _
      $region40: #{tpu_custom_call.1} parent=5 // pred_fallthru
        _
      %p305 = scmp.le.s32.totalorder 1, %s19
      %p306 = scmp.lt.s32.totalorder %s19, 3
      %p307 = pnand %p305, %p306
      %p308 = pneg %p307
      // Predicated region
      $region45: #{tpu_custom_call.1} parent=5 // pred_check
        _
      $region46: #{tpu_custom_call.1} parent=5 // pred_check_branch
        %310 = sbr.rel (%p307) target = $region48
      $region47: #{tpu_custom_call.1} parent=5 // pred_region
        %s311 = ssub.s32 %s19, 1
        %s312 = sand.u32 %s32, 1
        %s313 = scalar_lea.sflag [#allocation3], %s312
        %s314 = sand.u32 %s32, 1
        %s315 = smul.addr %s314, 8
        %s316 = scalar_lea.vmem [#allocation2], %s315
        // Predicated region
        $region49: #{tpu_custom_call.1} parent=47 // pred_check
          %p317 = pneg %p45
        $region50: #{tpu_custom_call.1} parent=47 // pred_check_branch
          %319 = sbr.rel (%p317) target = $region52
        $region51: #{tpu_custom_call.1} parent=47 // pred_region
          %321 = dma.done %s313, 128
        $region52: #{tpu_custom_call.1} parent=47 // pred_fallthru
          _
        // Predicated region
        $region53: #{tpu_custom_call.1} parent=47 // pred_check
          %p322 = pneg %p66
        $region54: #{tpu_custom_call.1} parent=47 // pred_check_branch
          %324 = sbr.rel (%p322) target = $region56
        $region55: #{tpu_custom_call.1} parent=47 // pred_region
          %326 = dma.done [#allocation6], 1536
        $region56: #{tpu_custom_call.1} parent=47 // pred_fallthru
          _
        // Predicated region
        $region57: #{tpu_custom_call.1} parent=47 // pred_check
          %p327 = pneg %p87
        $region58: #{tpu_custom_call.1} parent=47 // pred_check_branch
          %329 = sbr.rel (%p327) target = $region60
        $region59: #{tpu_custom_call.1} parent=47 // pred_region
          %331 = dma.done [#allocation6], 16
        $region60: #{tpu_custom_call.1} parent=47 // pred_fallthru
          _
        // Predicated region
        $region61: #{tpu_custom_call.1} parent=47 // pred_check
          %p332 = pneg %p108
        $region62: #{tpu_custom_call.1} parent=47 // pred_check_branch
          %334 = sbr.rel (%p332) target = $region64
        $region63: #{tpu_custom_call.1} parent=47 // pred_region
          %336 = dma.done [#allocation9], 18432
        $region64: #{tpu_custom_call.1} parent=47 // pred_fallthru
          _
        // Predicated region
        $region65: #{tpu_custom_call.1} parent=47 // pred_check
          %p337 = pneg %p129
        $region66: #{tpu_custom_call.1} parent=47 // pred_check_branch
          %339 = sbr.rel (%p337) target = $region68
        $region67: #{tpu_custom_call.1} parent=47 // pred_region
          %341 = dma.done [#allocation9], 96
        $region68: #{tpu_custom_call.1} parent=47 // pred_fallthru
          _
        // Predicated region
        $region69: #{tpu_custom_call.1} parent=47 // pred_check
          %p342 = pneg %p171
        $region70: #{tpu_custom_call.1} parent=47 // pred_check_branch
          %344 = sbr.rel (%p342) target = $region72
        $region71: #{tpu_custom_call.1} parent=47 // pred_region
          %346 = dma.done [#allocation4], 16
        $region72: #{tpu_custom_call.1} parent=47 // pred_fallthru
          _
        %347 = sfence
        %s348 = sand.u32 %s32, 1
        %s349 = scalar_lea.sflag [#allocation3], %s348
        %s350 = sand.u32 %s32, 1
        %s351 = smul.addr %s350, 8
        %s352 = scalar_lea.vmem [#allocation2], %s351
        %p353 = pneg %p45
        %p354 = pneg %p42
        %p355 = pneg %p66
        %p356 = pneg %p63
        %p357 = pneg %p87
        %p358 = pneg %p84
        %p359 = pneg %p108
        %p360 = pneg %p105
        %p361 = pneg %p129
        %p362 = pneg %p126
        %p363 = pneg %p150
        %p364 = pneg %p147
        %p365 = pneg %p171
        %p366 = pneg %p168
        %p367 = pneg %p197
        %p368 = pneg %p194
        %s369 = smul.u32 2, %s24
        %p370 = scmp.lt.s32.totalorder %s369, 3
        %s371 = scalar_select %p370, %s369, 3
        %s372 = smul.addr %s371, 8
        %s373 = scalar_lea.vmem %s7, %s372
        %s374 = smul.u32 2, %s24
        %s375 = smul.u32 2, %s24
        %p376 = scmp.lt.s32.totalorder %s375, 3
        %s377 = scalar_select %p376, %s375, 3
        %s378 = smul.addr %s377, 8
        %s379 = scalar_lea.vmem %s7, %s378
        %s380 = smul.u32 2, %s24
        %v382 = vlaneseq
        %v383 = vshrl.u32 %v382, 7
        %v384 = vadd.s32 %v383, 8
        %vm385 = vcmp.lt.s32.totalorder %v383, 0
        %v386 = vsub.s32 0, %v383
        %v387 = vsel %vm385, %v386, %v383
        %v388 = vshrl.u32 %v387, 4
        %v389 = vand.u32 %v387, 15
        %v390 = vsub.s32 0, %v389
        %v391 = vsel %vm385, %v390, %v389
        %vm392 = vcmp.lt.s32.totalorder %v384, 0
        %v393 = vsub.s32 0, %v384
        %v394 = vsel %vm392, %v393, %v384
        %v395 = vshrl.u32 %v394, 4
        %v396 = vand.u32 %v394, 15
        %v397 = vsub.s32 0, %v396
        %v398 = vsel %vm392, %v397, %v396
        %vm399 = vcmp.ne.s32.totalorder %v391, 0
        %vm400 = vcmp.ne.s32.totalorder %v398, 0
        %vm401 = vcmp.lt.s32.totalorder %v391, 0
        %vm402 = vcmp.lt.s32.totalorder %v398, 0
        %vm403 = vmand %vm401, %vm399
        %vm404 = vmand %vm402, %vm400
        %v405 = vadd.s32 %v391, 16
        %v406 = vadd.s32 %v398, 16
        %v407 = vsel %vm403, %v405, %v391
        %v408 = vsel %vm404, %v406, %v398
        %vm409 = vcmp.ne.s32.totalorder %v407, 0
        %vm410 = vcmp.ne.s32.totalorder %v408, 0
        %vm411 = vcmp.ne.s32.totalorder %v407, 15
        %vm412 = vcmp.ne.s32.totalorder %v408, 15
        %v413 = vsel %vm409, 1, 0
        %v414 = vsel %vm410, 1, 0
        %vm415 = vcmp.eq.s32.totalorder %v413, 1
        %vm416 = vcmp.eq.s32.totalorder %v414, 1
        %v417 = vsel %vm411, 1, 0
        %v418 = vsel %vm412, 1, 0
        %vm419 = vcmp.eq.s32.totalorder %v417, 1
        %vm420 = vcmp.eq.s32.totalorder %v418, 1
        %v421 = vld [vmem:[%s316] sm:$0xf]
        %v422 = vld [vmem:[%s316 + $0x4] sm:$0xf]
        %v423 = vld [vmem:[#allocation5] sm:$0xf]
        %v424 = vld [vmem:[#allocation5 + $0x4] sm:$0xf]
        %v425 = vld [vmem:[#allocation5 + $0x8] sm:$0xf]
        %v426 = vld [vmem:[#allocation5 + $0xc] sm:$0xf]
        %v427 = vld [vmem:[#allocation5 + $0x10] sm:$0xf]
        %v428 = vld [vmem:[#allocation5 + $0x14] sm:$0xf]
        %v429 = vld [vmem:[#allocation5 + $0x18] sm:$0xf]
        %v430 = vld [vmem:[#allocation5 + $0x1c] sm:$0xf]
        %s431 = scalar_lea.vmem [#allocation5], 32
        %v432 = vld [vmem:[%s431] sm:$0xf]
        %v433 = vld [vmem:[%s431 + $0x4] sm:$0xf]
        %v434 = vld [vmem:[%s431 + $0x8] sm:$0xf]
        %v435 = vld [vmem:[%s431 + $0xc] sm:$0xf]
        %v436 = vld [vmem:[%s431 + $0x10] sm:$0xf]
        %v437 = vld [vmem:[%s431 + $0x14] sm:$0xf]
        %v438 = vld [vmem:[%s431 + $0x18] sm:$0xf]
        %v439 = vld [vmem:[%s431 + $0x1c] sm:$0xf]
        %s440 = scalar_lea.vmem [#allocation5], 64
        %v441 = vld [vmem:[%s440] sm:$0xf]
        %v442 = vld [vmem:[%s440 + $0x4] sm:$0xf]
        %v443 = vld [vmem:[%s440 + $0x8] sm:$0xf]
        %v444 = vld [vmem:[%s440 + $0xc] sm:$0xf]
        %v445 = vld [vmem:[%s440 + $0x10] sm:$0xf]
        %v446 = vld [vmem:[%s440 + $0x14] sm:$0xf]
        %v447 = vld [vmem:[%s440 + $0x18] sm:$0xf]
        %v448 = vld [vmem:[%s440 + $0x1c] sm:$0xf]
        %v449 = vld [vmem:[#allocation7] sm:$0x1]
        %v452 = vunpack.c.l.b16 %v421
        %v453 = vunpack.c.l.b16 %v422
        %v454 = vpack.c.b16 %v453, %v452
        %v463 = vunpack.c.l.b16 %v423
        %v464 = vunpack.c.l.b16 %v424
        %v465 = vunpack.c.l.b16 %v425
        %v466 = vunpack.c.l.b16 %v426
        %v467 = vunpack.c.l.b16 %v427
        %v468 = vunpack.c.l.b16 %v428
        %v469 = vunpack.c.l.b16 %v429
        %v470 = vunpack.c.l.b16 %v430
        %v471 = vpack.c.b16 %v464, %v463
        %v472 = vpack.c.b16 %v466, %v465
        %v473 = vpack.c.b16 %v468, %v467
        %v474 = vpack.c.b16 %v470, %v469
        %vm479 = vcmask 523264
        %v481 = vsel %vm479, %v454, 0
        %483 = vmatpush.bf16.msra.mxu0 0
        %484 = vmatpush.bf16.msra.mxu0 0
        %485 = vmatpush.bf16.msra.mxu0 0
        %486 = vmatpush.bf16.msra.mxu0 0
        %487 = vmatpush.bf16.msra.mxu0 %v474
        %488 = vmatpush.bf16.msra.mxu0 %v473
        %489 = vmatpush.bf16.msra.mxu0 %v472
        %490 = vmatpush.bf16.msra.mxu0 %v471
        %491 = vmatmul.bf16.gmra.mxu0 %v481
        %v492 = vpop.f32.mrf.mxu0
        %v493 = vadd.f32 0.0, %v492
        %v494 = vpop.f32.mrf.mxu0
        %v495 = vadd.f32 0.0, %v494
        %496 = vdwg.mxu0
        %v505 = vunpack.c.l.b16 %v432
        %v506 = vunpack.c.l.b16 %v433
        %v507 = vunpack.c.l.b16 %v434
        %v508 = vunpack.c.l.b16 %v435
        %v509 = vunpack.c.l.b16 %v436
        %v510 = vunpack.c.l.b16 %v437
        %v511 = vunpack.c.l.b16 %v438
        %v512 = vunpack.c.l.b16 %v439
        %v513 = vpack.c.b16 %v506, %v505
        %v514 = vpack.c.b16 %v508, %v507
        %v515 = vpack.c.b16 %v510, %v509
        %v516 = vpack.c.b16 %v512, %v511
        %521 = vmatpush.bf16.msra.mxu0 0
        %522 = vmatpush.bf16.msra.mxu0 0
        %523 = vmatpush.bf16.msra.mxu0 0
        %524 = vmatpush.bf16.msra.mxu0 0
        %525 = vmatpush.bf16.msra.mxu0 %v516
        %526 = vmatpush.bf16.msra.mxu0 %v515
        %527 = vmatpush.bf16.msra.mxu0 %v514
        %528 = vmatpush.bf16.msra.mxu0 %v513
        %529 = vmatmul.bf16.gmra.mxu0 %v481
        %v530 = vpop.f32.mrf.mxu0
        %v531 = vadd.f32 0.0, %v530
        %v532 = vpop.f32.mrf.mxu0
        %v533 = vadd.f32 0.0, %v532
        %534 = vdwg.mxu0
        %v543 = vunpack.c.l.b16 %v441
        %v544 = vunpack.c.l.b16 %v442
        %v545 = vunpack.c.l.b16 %v443
        %v546 = vunpack.c.l.b16 %v444
        %v547 = vunpack.c.l.b16 %v445
        %v548 = vunpack.c.l.b16 %v446
        %v549 = vunpack.c.l.b16 %v447
        %v550 = vunpack.c.l.b16 %v448
        %v551 = vpack.c.b16 %v544, %v543
        %v552 = vpack.c.b16 %v546, %v545
        %v553 = vpack.c.b16 %v548, %v547
        %v554 = vpack.c.b16 %v550, %v549
        %559 = vmatpush.bf16.msra.mxu0 0
        %560 = vmatpush.bf16.msra.mxu0 0
        %561 = vmatpush.bf16.msra.mxu0 0
        %562 = vmatpush.bf16.msra.mxu0 0
        %563 = vmatpush.bf16.msra.mxu0 %v554
        %564 = vmatpush.bf16.msra.mxu0 %v553
        %565 = vmatpush.bf16.msra.mxu0 %v552
        %566 = vmatpush.bf16.msra.mxu0 %v551
        %567 = vmatmul.bf16.gmra.mxu0 %v481
        %v568 = vpop.f32.mrf.mxu0
        %v569 = vadd.f32 0.0, %v568
        %v570 = vpop.f32.mrf.mxu0
        %v571 = vadd.f32 0.0, %v570
        %572 = vdwg.mxu0
        %v573 = vrot.slane %v493, 7
        %v574 = vrot.slane %v495, 7
        %vm575 = vcmp.lt.s32.totalorder %v383, 1
        %v576 = vsel %vm575, %v573, %v574
        %v577 = vsel %vm575, %v574, %v573
        %v578 = vsel %vm415, %v577, 0.0
        %v579 = vsel %vm416, %v576, 0.0
        %v580 = vadd.f32 %v578, %v531
        %v581 = vadd.f32 %v579, %v533
        %v583 = vperm.slane %v449, 0
        %v585 = vadd.f32 %v580, %v583
        %v586 = vadd.f32 %v581, %v583
        %v587 = vrot.slane %v569, 1
        %v588 = vrot.slane %v571, 1
        %vm589 = vcmp.lt.s32.totalorder %v383, 7
        %v590 = vsel %vm589, %v587, %v588
        %v591 = vsel %vm589, %v588, %v587
        %v592 = vsel %vm419, %v590, 0.0
        %v593 = vsel %vm420, %v591, 0.0
        %v594 = vadd.f32 %v585, %v592
        %v595 = vadd.f32 %v586, %v593
        %vm596 = vcmp.gt.f32.partialorder %v594, 0.0
        %vm597 = vcmp.gt.f32.partialorder %v595, 0.0
        %v598 = vmul.f32 %v594, 0.01
        %v599 = vmul.f32 %v595, 0.01
        %v600 = vsel %vm596, %v594, %v598
        %v601 = vsel %vm597, %v595, %v599
        %v602 = vpack.c.bf16 %v601, %v600
        %v603 = vld [vmem:[#allocation8] sm:$0xf]
        %v604 = vld [vmem:[#allocation8 + $0x4] sm:$0xf]
        %v605 = vld [vmem:[#allocation8 + $0x8] sm:$0xf]
        %v606 = vld [vmem:[#allocation8 + $0xc] sm:$0xf]
        %v607 = vld [vmem:[#allocation8 + $0x10] sm:$0xf]
        %v608 = vld [vmem:[#allocation8 + $0x14] sm:$0xf]
        %v609 = vld [vmem:[#allocation8 + $0x18] sm:$0xf]
        %v610 = vld [vmem:[#allocation8 + $0x1c] sm:$0xf]
        %v611 = vld [vmem:[#allocation8 + $0x20] sm:$0xf]
        %v612 = vld [vmem:[#allocation8 + $0x24] sm:$0xf]
        %v613 = vld [vmem:[#allocation8 + $0x28] sm:$0xf]
        %v614 = vld [vmem:[#allocation8 + $0x2c] sm:$0xf]
        %v615 = vld [vmem:[#allocation8 + $0x30] sm:$0xf]
        %v616 = vld [vmem:[#allocation8 + $0x34] sm:$0xf]
        %v617 = vld [vmem:[#allocation8 + $0x38] sm:$0xf]
        %v618 = vld [vmem:[#allocation8 + $0x3c] sm:$0xf]
        %s619 = scalar_lea.vmem [#allocation8], 64
        %v620 = vld [vmem:[%s619] sm:$0xf]
        %v621 = vld [vmem:[%s619 + $0x4] sm:$0xf]
        %v622 = vld [vmem:[%s619 + $0x8] sm:$0xf]
        %v623 = vld [vmem:[%s619 + $0xc] sm:$0xf]
        %v624 = vld [vmem:[%s619 + $0x10] sm:$0xf]
        %v625 = vld [vmem:[%s619 + $0x14] sm:$0xf]
        %v626 = vld [vmem:[%s619 + $0x18] sm:$0xf]
        %v627 = vld [vmem:[%s619 + $0x1c] sm:$0xf]
        %v628 = vld [vmem:[%s619 + $0x20] sm:$0xf]
        %v629 = vld [vmem:[%s619 + $0x24] sm:$0xf]
        %v630 = vld [vmem:[%s619 + $0x28] sm:$0xf]
        %v631 = vld [vmem:[%s619 + $0x2c] sm:$0xf]
        %v632 = vld [vmem:[%s619 + $0x30] sm:$0xf]
        %v633 = vld [vmem:[%s619 + $0x34] sm:$0xf]
        %v634 = vld [vmem:[%s619 + $0x38] sm:$0xf]
        %v635 = vld [vmem:[%s619 + $0x3c] sm:$0xf]
        %s636 = scalar_lea.vmem [#allocation8], 128
        %v637 = vld [vmem:[%s636] sm:$0xf]
        %v638 = vld [vmem:[%s636 + $0x4] sm:$0xf]
        %v639 = vld [vmem:[%s636 + $0x8] sm:$0xf]
        %v640 = vld [vmem:[%s636 + $0xc] sm:$0xf]
        %v641 = vld [vmem:[%s636 + $0x10] sm:$0xf]
        %v642 = vld [vmem:[%s636 + $0x14] sm:$0xf]
        %v643 = vld [vmem:[%s636 + $0x18] sm:$0xf]
        %v644 = vld [vmem:[%s636 + $0x1c] sm:$0xf]
        %v645 = vld [vmem:[%s636 + $0x20] sm:$0xf]
        %v646 = vld [vmem:[%s636 + $0x24] sm:$0xf]
        %v647 = vld [vmem:[%s636 + $0x28] sm:$0xf]
        %v648 = vld [vmem:[%s636 + $0x2c] sm:$0xf]
        %v649 = vld [vmem:[%s636 + $0x30] sm:$0xf]
        %v650 = vld [vmem:[%s636 + $0x34] sm:$0xf]
        %v651 = vld [vmem:[%s636 + $0x38] sm:$0xf]
        %v652 = vld [vmem:[%s636 + $0x3c] sm:$0xf]
        %v653 = vld [vmem:[#allocation10] sm:$0x1]
        %v670 = vunpack.c.l.b16 %v603
        %v671 = vunpack.c.l.b16 %v604
        %v672 = vunpack.c.l.b16 %v605
        %v673 = vunpack.c.l.b16 %v606
        %v674 = vunpack.c.l.b16 %v607
        %v675 = vunpack.c.l.b16 %v608
        %v676 = vunpack.c.l.b16 %v609
        %v677 = vunpack.c.l.b16 %v610
        %v678 = vunpack.c.l.b16 %v611
        %v679 = vunpack.c.l.b16 %v612
        %v680 = vunpack.c.l.b16 %v613
        %v681 = vunpack.c.l.b16 %v614
        %v682 = vunpack.c.l.b16 %v615
        %v683 = vunpack.c.l.b16 %v616
        %v684 = vunpack.c.l.b16 %v617
        %v685 = vunpack.c.l.b16 %v618
        %v686 = vpack.c.b16 %v671, %v670
        %v687 = vpack.c.b16 %v673, %v672
        %v688 = vpack.c.b16 %v675, %v674
        %v689 = vpack.c.b16 %v677, %v676
        %v690 = vpack.c.b16 %v679, %v678
        %v691 = vpack.c.b16 %v681, %v680
        %v692 = vpack.c.b16 %v683, %v682
        %v693 = vpack.c.b16 %v685, %v684
        %702 = vmatpush.bf16.msra.mxu0 %v693
        %703 = vmatpush.bf16.msra.mxu0 %v692
        %704 = vmatpush.bf16.msra.mxu0 %v691
        %705 = vmatpush.bf16.msra.mxu0 %v690
        %706 = vmatpush.bf16.msra.mxu0 %v689
        %707 = vmatpush.bf16.msra.mxu0 %v688
        %708 = vmatpush.bf16.msra.mxu0 %v687
        %709 = vmatpush.bf16.msra.mxu0 %v686
        %710 = vmatmul.bf16.gmra.mxu0 %v602
        %v711 = vpop.f32.mrf.mxu0
        %v712 = vadd.f32 0.0, %v711
        %v713 = vpop.f32.mrf.mxu0
        %v714 = vadd.f32 0.0, %v713
        %715 = vdwg.mxu0
        %v732 = vunpack.c.l.b16 %v620
        %v733 = vunpack.c.l.b16 %v621
        %v734 = vunpack.c.l.b16 %v622
        %v735 = vunpack.c.l.b16 %v623
        %v736 = vunpack.c.l.b16 %v624
        %v737 = vunpack.c.l.b16 %v625
        %v738 = vunpack.c.l.b16 %v626
        %v739 = vunpack.c.l.b16 %v627
        %v740 = vunpack.c.l.b16 %v628
        %v741 = vunpack.c.l.b16 %v629
        %v742 = vunpack.c.l.b16 %v630
        %v743 = vunpack.c.l.b16 %v631
        %v744 = vunpack.c.l.b16 %v632
        %v745 = vunpack.c.l.b16 %v633
        %v746 = vunpack.c.l.b16 %v634
        %v747 = vunpack.c.l.b16 %v635
        %v748 = vpack.c.b16 %v733, %v732
        %v749 = vpack.c.b16 %v735, %v734
        %v750 = vpack.c.b16 %v737, %v736
        %v751 = vpack.c.b16 %v739, %v738
        %v752 = vpack.c.b16 %v741, %v740
        %v753 = vpack.c.b16 %v743, %v742
        %v754 = vpack.c.b16 %v745, %v744
        %v755 = vpack.c.b16 %v747, %v746
        %764 = vmatpush.bf16.msra.mxu0 %v755
        %765 = vmatpush.bf16.msra.mxu0 %v754
        %766 = vmatpush.bf16.msra.mxu0 %v753
        %767 = vmatpush.bf16.msra.mxu0 %v752
        %768 = vmatpush.bf16.msra.mxu0 %v751
        %769 = vmatpush.bf16.msra.mxu0 %v750
        %770 = vmatpush.bf16.msra.mxu0 %v749
        %771 = vmatpush.bf16.msra.mxu0 %v748
        %772 = vmatmul.bf16.gmra.mxu0 %v602
        %v773 = vpop.f32.mrf.mxu0
        %v774 = vadd.f32 0.0, %v773
        %v775 = vpop.f32.mrf.mxu0
        %v776 = vadd.f32 0.0, %v775
        %777 = vdwg.mxu0
        %v794 = vunpack.c.l.b16 %v637
        %v795 = vunpack.c.l.b16 %v638
        %v796 = vunpack.c.l.b16 %v639
        %v797 = vunpack.c.l.b16 %v640
        %v798 = vunpack.c.l.b16 %v641
        %v799 = vunpack.c.l.b16 %v642
        %v800 = vunpack.c.l.b16 %v643
        %v801 = vunpack.c.l.b16 %v644
        %v802 = vunpack.c.l.b16 %v645
        %v803 = vunpack.c.l.b16 %v646
        %v804 = vunpack.c.l.b16 %v647
        %v805 = vunpack.c.l.b16 %v648
        %v806 = vunpack.c.l.b16 %v649
        %v807 = vunpack.c.l.b16 %v650
        %v808 = vunpack.c.l.b16 %v651
        %v809 = vunpack.c.l.b16 %v652
        %v810 = vpack.c.b16 %v795, %v794
        %v811 = vpack.c.b16 %v797, %v796
        %v812 = vpack.c.b16 %v799, %v798
        %v813 = vpack.c.b16 %v801, %v800
        %v814 = vpack.c.b16 %v803, %v802
        %v815 = vpack.c.b16 %v805, %v804
        %v816 = vpack.c.b16 %v807, %v806
        %v817 = vpack.c.b16 %v809, %v808
        %826 = vmatpush.bf16.msra.mxu0 %v817
        %827 = vmatpush.bf16.msra.mxu0 %v816
        %828 = vmatpush.bf16.msra.mxu0 %v815
        %829 = vmatpush.bf16.msra.mxu0 %v814
        %830 = vmatpush.bf16.msra.mxu0 %v813
        %831 = vmatpush.bf16.msra.mxu0 %v812
        %832 = vmatpush.bf16.msra.mxu0 %v811
        %833 = vmatpush.bf16.msra.mxu0 %v810
        %834 = vmatmul.bf16.gmra.mxu0 %v602
        %v835 = vpop.f32.mrf.mxu0
        %v836 = vadd.f32 0.0, %v835
        %v837 = vpop.f32.mrf.mxu0
        %v838 = vadd.f32 0.0, %v837
        %839 = vdwg.mxu0
        %v840 = vrot.slane %v712, 7
        %v841 = vrot.slane %v714, 7
        %v842 = vsel %vm575, %v840, %v841
        %v843 = vsel %vm575, %v841, %v840
        %v844 = vsel %vm415, %v843, 0.0
        %v845 = vsel %vm416, %v842, 0.0
        %v846 = vadd.f32 %v844, %v774
        %v847 = vadd.f32 %v845, %v776
        %v849 = vperm.slane %v653, 0
        %v851 = vadd.f32 %v846, %v849
        %v852 = vadd.f32 %v847, %v849
        %v853 = vrot.slane %v836, 1
        %v854 = vrot.slane %v838, 1
        %v855 = vsel %vm589, %v853, %v854
        %v856 = vsel %vm589, %v854, %v853
        %v857 = vsel %vm419, %v855, 0.0
        %v858 = vsel %vm420, %v856, 0.0
        %v859 = vadd.f32 %v851, %v857
        %v860 = vadd.f32 %v852, %v858
        %vm861 = vcmp.gt.f32.partialorder %v859, 0.0
        %vm862 = vcmp.gt.f32.partialorder %v860, 0.0
        %v863 = vmul.f32 %v859, 0.01
        %v864 = vmul.f32 %v860, 0.01
        %v865 = vsel %vm861, %v859, %v863
        %v866 = vsel %vm862, %v860, %v864
        %v867 = vpack.c.bf16 %v866, %v865
        %s868 = scalar_lea.vmem [#allocation8], 192
        %v869 = vld [vmem:[%s868] sm:$0xf]
        %v870 = vld [vmem:[%s868 + $0x4] sm:$0xf]
        %v871 = vld [vmem:[%s868 + $0x8] sm:$0xf]
        %v872 = vld [vmem:[%s868 + $0xc] sm:$0xf]
        %v873 = vld [vmem:[%s868 + $0x10] sm:$0xf]
        %v874 = vld [vmem:[%s868 + $0x14] sm:$0xf]
        %v875 = vld [vmem:[%s868 + $0x18] sm:$0xf]
        %v876 = vld [vmem:[%s868 + $0x1c] sm:$0xf]
        %v877 = vld [vmem:[%s868 + $0x20] sm:$0xf]
        %v878 = vld [vmem:[%s868 + $0x24] sm:$0xf]
        %v879 = vld [vmem:[%s868 + $0x28] sm:$0xf]
        %v880 = vld [vmem:[%s868 + $0x2c] sm:$0xf]
        %v881 = vld [vmem:[%s868 + $0x30] sm:$0xf]
        %v882 = vld [vmem:[%s868 + $0x34] sm:$0xf]
        %v883 = vld [vmem:[%s868 + $0x38] sm:$0xf]
        %v884 = vld [vmem:[%s868 + $0x3c] sm:$0xf]
        %s885 = scalar_lea.vmem [#allocation8], 256
        %v886 = vld [vmem:[%s885] sm:$0xf]
        %v887 = vld [vmem:[%s885 + $0x4] sm:$0xf]
        %v888 = vld [vmem:[%s885 + $0x8] sm:$0xf]
        %v889 = vld [vmem:[%s885 + $0xc] sm:$0xf]
        %v890 = vld [vmem:[%s885 + $0x10] sm:$0xf]
        %v891 = vld [vmem:[%s885 + $0x14] sm:$0xf]
        %v892 = vld [vmem:[%s885 + $0x18] sm:$0xf]
        %v893 = vld [vmem:[%s885 + $0x1c] sm:$0xf]
        %v894 = vld [vmem:[%s885 + $0x20] sm:$0xf]
        %v895 = vld [vmem:[%s885 + $0x24] sm:$0xf]
        %v896 = vld [vmem:[%s885 + $0x28] sm:$0xf]
        %v897 = vld [vmem:[%s885 + $0x2c] sm:$0xf]
        %v898 = vld [vmem:[%s885 + $0x30] sm:$0xf]
        %v899 = vld [vmem:[%s885 + $0x34] sm:$0xf]
        %v900 = vld [vmem:[%s885 + $0x38] sm:$0xf]
        %v901 = vld [vmem:[%s885 + $0x3c] sm:$0xf]
        %s902 = scalar_lea.vmem [#allocation8], 320
        %v903 = vld [vmem:[%s902] sm:$0xf]
        %v904 = vld [vmem:[%s902 + $0x4] sm:$0xf]
        %v905 = vld [vmem:[%s902 + $0x8] sm:$0xf]
        %v906 = vld [vmem:[%s902 + $0xc] sm:$0xf]
        %v907 = vld [vmem:[%s902 + $0x10] sm:$0xf]
        %v908 = vld [vmem:[%s902 + $0x14] sm:$0xf]
        %v909 = vld [vmem:[%s902 + $0x18] sm:$0xf]
        %v910 = vld [vmem:[%s902 + $0x1c] sm:$0xf]
        %v911 = vld [vmem:[%s902 + $0x20] sm:$0xf]
        %v912 = vld [vmem:[%s902 + $0x24] sm:$0xf]
        %v913 = vld [vmem:[%s902 + $0x28] sm:$0xf]
        %v914 = vld [vmem:[%s902 + $0x2c] sm:$0xf]
        %v915 = vld [vmem:[%s902 + $0x30] sm:$0xf]
        %v916 = vld [vmem:[%s902 + $0x34] sm:$0xf]
        %v917 = vld [vmem:[%s902 + $0x38] sm:$0xf]
        %v918 = vld [vmem:[%s902 + $0x3c] sm:$0xf]
        %s919 = scalar_lea.vmem [#allocation10], 1
        %v920 = vld [vmem:[%s919] sm:$0x1]
        %v937 = vunpack.c.l.b16 %v869
        %v938 = vunpack.c.l.b16 %v870
        %v939 = vunpack.c.l.b16 %v871
        %v940 = vunpack.c.l.b16 %v872
        %v941 = vunpack.c.l.b16 %v873
        %v942 = vunpack.c.l.b16 %v874
        %v943 = vunpack.c.l.b16 %v875
        %v944 = vunpack.c.l.b16 %v876
        %v945 = vunpack.c.l.b16 %v877
        %v946 = vunpack.c.l.b16 %v878
        %v947 = vunpack.c.l.b16 %v879
        %v948 = vunpack.c.l.b16 %v880
        %v949 = vunpack.c.l.b16 %v881
        %v950 = vunpack.c.l.b16 %v882
        %v951 = vunpack.c.l.b16 %v883
        %v952 = vunpack.c.l.b16 %v884
        %v953 = vpack.c.b16 %v938, %v937
        %v954 = vpack.c.b16 %v940, %v939
        %v955 = vpack.c.b16 %v942, %v941
        %v956 = vpack.c.b16 %v944, %v943
        %v957 = vpack.c.b16 %v946, %v945
        %v958 = vpack.c.b16 %v948, %v947
        %v959 = vpack.c.b16 %v950, %v949
        %v960 = vpack.c.b16 %v952, %v951
        %969 = vmatpush.bf16.msra.mxu0 %v960
        %970 = vmatpush.bf16.msra.mxu0 %v959
        %971 = vmatpush.bf16.msra.mxu0 %v958
        %972 = vmatpush.bf16.msra.mxu0 %v957
        %973 = vmatpush.bf16.msra.mxu0 %v956
        %974 = vmatpush.bf16.msra.mxu0 %v955
        %975 = vmatpush.bf16.msra.mxu0 %v954
        %976 = vmatpush.bf16.msra.mxu0 %v953
        %977 = vmatmul.bf16.gmra.mxu0 %v867
        %v978 = vpop.f32.mrf.mxu0
        %v979 = vadd.f32 0.0, %v978
        %v980 = vpop.f32.mrf.mxu0
        %v981 = vadd.f32 0.0, %v980
        %982 = vdwg.mxu0
        %v999 = vunpack.c.l.b16 %v886
        %v1000 = vunpack.c.l.b16 %v887
        %v1001 = vunpack.c.l.b16 %v888
        %v1002 = vunpack.c.l.b16 %v889
        %v1003 = vunpack.c.l.b16 %v890
        %v1004 = vunpack.c.l.b16 %v891
        %v1005 = vunpack.c.l.b16 %v892
        %v1006 = vunpack.c.l.b16 %v893
        %v1007 = vunpack.c.l.b16 %v894
        %v1008 = vunpack.c.l.b16 %v895
        %v1009 = vunpack.c.l.b16 %v896
        %v1010 = vunpack.c.l.b16 %v897
        %v1011 = vunpack.c.l.b16 %v898
        %v1012 = vunpack.c.l.b16 %v899
        %v1013 = vunpack.c.l.b16 %v900
        %v1014 = vunpack.c.l.b16 %v901
        %v1015 = vpack.c.b16 %v1000, %v999
        %v1016 = vpack.c.b16 %v1002, %v1001
        %v1017 = vpack.c.b16 %v1004, %v1003
        %v1018 = vpack.c.b16 %v1006, %v1005
        %v1019 = vpack.c.b16 %v1008, %v1007
        %v1020 = vpack.c.b16 %v1010, %v1009
        %v1021 = vpack.c.b16 %v1012, %v1011
        %v1022 = vpack.c.b16 %v1014, %v1013
        %1031 = vmatpush.bf16.msra.mxu0 %v1022
        %1032 = vmatpush.bf16.msra.mxu0 %v1021
        %1033 = vmatpush.bf16.msra.mxu0 %v1020
        %1034 = vmatpush.bf16.msra.mxu0 %v1019
        %1035 = vmatpush.bf16.msra.mxu0 %v1018
        %1036 = vmatpush.bf16.msra.mxu0 %v1017
        %1037 = vmatpush.bf16.msra.mxu0 %v1016
        %1038 = vmatpush.bf16.msra.mxu0 %v1015
        %1039 = vmatmul.bf16.gmra.mxu0 %v867
        %v1040 = vpop.f32.mrf.mxu0
        %v1041 = vadd.f32 0.0, %v1040
        %v1042 = vpop.f32.mrf.mxu0
        %v1043 = vadd.f32 0.0, %v1042
        %1044 = vdwg.mxu0
        %v1061 = vunpack.c.l.b16 %v903
        %v1062 = vunpack.c.l.b16 %v904
        %v1063 = vunpack.c.l.b16 %v905
        %v1064 = vunpack.c.l.b16 %v906
        %v1065 = vunpack.c.l.b16 %v907
        %v1066 = vunpack.c.l.b16 %v908
        %v1067 = vunpack.c.l.b16 %v909
        %v1068 = vunpack.c.l.b16 %v910
        %v1069 = vunpack.c.l.b16 %v911
        %v1070 = vunpack.c.l.b16 %v912
        %v1071 = vunpack.c.l.b16 %v913
        %v1072 = vunpack.c.l.b16 %v914
        %v1073 = vunpack.c.l.b16 %v915
        %v1074 = vunpack.c.l.b16 %v916
        %v1075 = vunpack.c.l.b16 %v917
        %v1076 = vunpack.c.l.b16 %v918
        %v1077 = vpack.c.b16 %v1062, %v1061
        %v1078 = vpack.c.b16 %v1064, %v1063
        %v1079 = vpack.c.b16 %v1066, %v1065
        %v1080 = vpack.c.b16 %v1068, %v1067
        %v1081 = vpack.c.b16 %v1070, %v1069
        %v1082 = vpack.c.b16 %v1072, %v1071
        %v1083 = vpack.c.b16 %v1074, %v1073
        %v1084 = vpack.c.b16 %v1076, %v1075
        %1093 = vmatpush.bf16.msra.mxu0 %v1084
        %1094 = vmatpush.bf16.msra.mxu0 %v1083
        %1095 = vmatpush.bf16.msra.mxu0 %v1082
        %1096 = vmatpush.bf16.msra.mxu0 %v1081
        %1097 = vmatpush.bf16.msra.mxu0 %v1080
        %1098 = vmatpush.bf16.msra.mxu0 %v1079
        %1099 = vmatpush.bf16.msra.mxu0 %v1078
        %1100 = vmatpush.bf16.msra.mxu0 %v1077
        %1101 = vmatmul.bf16.gmra.mxu0 %v867
        %v1102 = vpop.f32.mrf.mxu0
        %v1103 = vadd.f32 0.0, %v1102
        %v1104 = vpop.f32.mrf.mxu0
        %v1105 = vadd.f32 0.0, %v1104
        %1106 = vdwg.mxu0
        %v1107 = vrot.slane %v979, 7
        %v1108 = vrot.slane %v981, 7
        %v1109 = vsel %vm575, %v1107, %v1108
        %v1110 = vsel %vm575, %v1108, %v1107
        %v1111 = vsel %vm415, %v1110, 0.0
        %v1112 = vsel %vm416, %v1109, 0.0
        %v1113 = vadd.f32 %v1111, %v1041
        %v1114 = vadd.f32 %v1112, %v1043
        %v1116 = vperm.slane %v920, 0
        %v1118 = vadd.f32 %v1113, %v1116
        %v1119 = vadd.f32 %v1114, %v1116
        %v1120 = vrot.slane %v1103, 1
        %v1121 = vrot.slane %v1105, 1
        %v1122 = vsel %vm589, %v1120, %v1121
        %v1123 = vsel %vm589, %v1121, %v1120
        %v1124 = vsel %vm419, %v1122, 0.0
        %v1125 = vsel %vm420, %v1123, 0.0
        %v1126 = vadd.f32 %v1118, %v1124
        %v1127 = vadd.f32 %v1119, %v1125
        %vm1128 = vcmp.gt.f32.partialorder %v1126, 0.0
        %vm1129 = vcmp.gt.f32.partialorder %v1127, 0.0
        %v1130 = vmul.f32 %v1126, 0.01
        %v1131 = vmul.f32 %v1127, 0.01
        %v1132 = vsel %vm1128, %v1126, %v1130
        %v1133 = vsel %vm1129, %v1127, %v1131
        %v1134 = vpack.c.bf16 %v1133, %v1132
        %s1135 = scalar_lea.vmem [#allocation8], 384
        %v1136 = vld [vmem:[%s1135] sm:$0xf]
        %v1137 = vld [vmem:[%s1135 + $0x4] sm:$0xf]
        %v1138 = vld [vmem:[%s1135 + $0x8] sm:$0xf]
        %v1139 = vld [vmem:[%s1135 + $0xc] sm:$0xf]
        %v1140 = vld [vmem:[%s1135 + $0x10] sm:$0xf]
        %v1141 = vld [vmem:[%s1135 + $0x14] sm:$0xf]
        %v1142 = vld [vmem:[%s1135 + $0x18] sm:$0xf]
        %v1143 = vld [vmem:[%s1135 + $0x1c] sm:$0xf]
        %v1144 = vld [vmem:[%s1135 + $0x20] sm:$0xf]
        %v1145 = vld [vmem:[%s1135 + $0x24] sm:$0xf]
        %v1146 = vld [vmem:[%s1135 + $0x28] sm:$0xf]
        %v1147 = vld [vmem:[%s1135 + $0x2c] sm:$0xf]
        %v1148 = vld [vmem:[%s1135 + $0x30] sm:$0xf]
        %v1149 = vld [vmem:[%s1135 + $0x34] sm:$0xf]
        %v1150 = vld [vmem:[%s1135 + $0x38] sm:$0xf]
        %v1151 = vld [vmem:[%s1135 + $0x3c] sm:$0xf]
        %s1152 = scalar_lea.vmem [#allocation8], 448
        %v1153 = vld [vmem:[%s1152] sm:$0xf]
        %v1154 = vld [vmem:[%s1152 + $0x4] sm:$0xf]
        %v1155 = vld [vmem:[%s1152 + $0x8] sm:$0xf]
        %v1156 = vld [vmem:[%s1152 + $0xc] sm:$0xf]
        %v1157 = vld [vmem:[%s1152 + $0x10] sm:$0xf]
        %v1158 = vld [vmem:[%s1152 + $0x14] sm:$0xf]
        %v1159 = vld [vmem:[%s1152 + $0x18] sm:$0xf]
        %v1160 = vld [vmem:[%s1152 + $0x1c] sm:$0xf]
        %v1161 = vld [vmem:[%s1152 + $0x20] sm:$0xf]
        %v1162 = vld [vmem:[%s1152 + $0x24] sm:$0xf]
        %v1163 = vld [vmem:[%s1152 + $0x28] sm:$0xf]
        %v1164 = vld [vmem:[%s1152 + $0x2c] sm:$0xf]
        %v1165 = vld [vmem:[%s1152 + $0x30] sm:$0xf]
        %v1166 = vld [vmem:[%s1152 + $0x34] sm:$0xf]
        %v1167 = vld [vmem:[%s1152 + $0x38] sm:$0xf]
        %v1168 = vld [vmem:[%s1152 + $0x3c] sm:$0xf]
        %s1169 = scalar_lea.vmem [#allocation8], 512
        %v1170 = vld [vmem:[%s1169] sm:$0xf]
        %v1171 = vld [vmem:[%s1169 + $0x4] sm:$0xf]
        %v1172 = vld [vmem:[%s1169 + $0x8] sm:$0xf]
        %v1173 = vld [vmem:[%s1169 + $0xc] sm:$0xf]
        %v1174 = vld [vmem:[%s1169 + $0x10] sm:$0xf]
        %v1175 = vld [vmem:[%s1169 + $0x14] sm:$0xf]
        %v1176 = vld [vmem:[%s1169 + $0x18] sm:$0xf]
        %v1177 = vld [vmem:[%s1169 + $0x1c] sm:$0xf]
        %v1178 = vld [vmem:[%s1169 + $0x20] sm:$0xf]
        %v1179 = vld [vmem:[%s1169 + $0x24] sm:$0xf]
        %v1180 = vld [vmem:[%s1169 + $0x28] sm:$0xf]
        %v1181 = vld [vmem:[%s1169 + $0x2c] sm:$0xf]
        %v1182 = vld [vmem:[%s1169 + $0x30] sm:$0xf]
        %v1183 = vld [vmem:[%s1169 + $0x34] sm:$0xf]
        %v1184 = vld [vmem:[%s1169 + $0x38] sm:$0xf]
        %v1185 = vld [vmem:[%s1169 + $0x3c] sm:$0xf]
        %s1186 = scalar_lea.vmem [#allocation10], 2
        %v1187 = vld [vmem:[%s1186] sm:$0x1]
        %v1204 = vunpack.c.l.b16 %v1136
        %v1205 = vunpack.c.l.b16 %v1137
        %v1206 = vunpack.c.l.b16 %v1138
        %v1207 = vunpack.c.l.b16 %v1139
        %v1208 = vunpack.c.l.b16 %v1140
        %v1209 = vunpack.c.l.b16 %v1141
        %v1210 = vunpack.c.l.b16 %v1142
        %v1211 = vunpack.c.l.b16 %v1143
        %v1212 = vunpack.c.l.b16 %v1144
        %v1213 = vunpack.c.l.b16 %v1145
        %v1214 = vunpack.c.l.b16 %v1146
        %v1215 = vunpack.c.l.b16 %v1147
        %v1216 = vunpack.c.l.b16 %v1148
        %v1217 = vunpack.c.l.b16 %v1149
        %v1218 = vunpack.c.l.b16 %v1150
        %v1219 = vunpack.c.l.b16 %v1151
        %v1220 = vpack.c.b16 %v1205, %v1204
        %v1221 = vpack.c.b16 %v1207, %v1206
        %v1222 = vpack.c.b16 %v1209, %v1208
        %v1223 = vpack.c.b16 %v1211, %v1210
        %v1224 = vpack.c.b16 %v1213, %v1212
        %v1225 = vpack.c.b16 %v1215, %v1214
        %v1226 = vpack.c.b16 %v1217, %v1216
        %v1227 = vpack.c.b16 %v1219, %v1218
        %1236 = vmatpush.bf16.msra.mxu0 %v1227
        %1237 = vmatpush.bf16.msra.mxu0 %v1226
        %1238 = vmatpush.bf16.msra.mxu0 %v1225
        %1239 = vmatpush.bf16.msra.mxu0 %v1224
        %1240 = vmatpush.bf16.msra.mxu0 %v1223
        %1241 = vmatpush.bf16.msra.mxu0 %v1222
        %1242 = vmatpush.bf16.msra.mxu0 %v1221
        %1243 = vmatpush.bf16.msra.mxu0 %v1220
        %1244 = vmatmul.bf16.gmra.mxu0 %v1134
        %v1245 = vpop.f32.mrf.mxu0
        %v1246 = vadd.f32 0.0, %v1245
        %v1247 = vpop.f32.mrf.mxu0
        %v1248 = vadd.f32 0.0, %v1247
        %1249 = vdwg.mxu0
        %v1266 = vunpack.c.l.b16 %v1153
        %v1267 = vunpack.c.l.b16 %v1154
        %v1268 = vunpack.c.l.b16 %v1155
        %v1269 = vunpack.c.l.b16 %v1156
        %v1270 = vunpack.c.l.b16 %v1157
        %v1271 = vunpack.c.l.b16 %v1158
        %v1272 = vunpack.c.l.b16 %v1159
        %v1273 = vunpack.c.l.b16 %v1160
        %v1274 = vunpack.c.l.b16 %v1161
        %v1275 = vunpack.c.l.b16 %v1162
        %v1276 = vunpack.c.l.b16 %v1163
        %v1277 = vunpack.c.l.b16 %v1164
        %v1278 = vunpack.c.l.b16 %v1165
        %v1279 = vunpack.c.l.b16 %v1166
        %v1280 = vunpack.c.l.b16 %v1167
        %v1281 = vunpack.c.l.b16 %v1168
        %v1282 = vpack.c.b16 %v1267, %v1266
        %v1283 = vpack.c.b16 %v1269, %v1268
        %v1284 = vpack.c.b16 %v1271, %v1270
        %v1285 = vpack.c.b16 %v1273, %v1272
        %v1286 = vpack.c.b16 %v1275, %v1274
        %v1287 = vpack.c.b16 %v1277, %v1276
        %v1288 = vpack.c.b16 %v1279, %v1278
        %v1289 = vpack.c.b16 %v1281, %v1280
        %1298 = vmatpush.bf16.msra.mxu0 %v1289
        %1299 = vmatpush.bf16.msra.mxu0 %v1288
        %1300 = vmatpush.bf16.msra.mxu0 %v1287
        %1301 = vmatpush.bf16.msra.mxu0 %v1286
        %1302 = vmatpush.bf16.msra.mxu0 %v1285
        %1303 = vmatpush.bf16.msra.mxu0 %v1284
        %1304 = vmatpush.bf16.msra.mxu0 %v1283
        %1305 = vmatpush.bf16.msra.mxu0 %v1282
        %1306 = vmatmul.bf16.gmra.mxu0 %v1134
        %v1307 = vpop.f32.mrf.mxu0
        %v1308 = vadd.f32 0.0, %v1307
        %v1309 = vpop.f32.mrf.mxu0
        %v1310 = vadd.f32 0.0, %v1309
        %1311 = vdwg.mxu0
        %v1328 = vunpack.c.l.b16 %v1170
        %v1329 = vunpack.c.l.b16 %v1171
        %v1330 = vunpack.c.l.b16 %v1172
        %v1331 = vunpack.c.l.b16 %v1173
        %v1332 = vunpack.c.l.b16 %v1174
        %v1333 = vunpack.c.l.b16 %v1175
        %v1334 = vunpack.c.l.b16 %v1176
        %v1335 = vunpack.c.l.b16 %v1177
        %v1336 = vunpack.c.l.b16 %v1178
        %v1337 = vunpack.c.l.b16 %v1179
        %v1338 = vunpack.c.l.b16 %v1180
        %v1339 = vunpack.c.l.b16 %v1181
        %v1340 = vunpack.c.l.b16 %v1182
        %v1341 = vunpack.c.l.b16 %v1183
        %v1342 = vunpack.c.l.b16 %v1184
        %v1343 = vunpack.c.l.b16 %v1185
        %v1344 = vpack.c.b16 %v1329, %v1328
        %v1345 = vpack.c.b16 %v1331, %v1330
        %v1346 = vpack.c.b16 %v1333, %v1332
        %v1347 = vpack.c.b16 %v1335, %v1334
        %v1348 = vpack.c.b16 %v1337, %v1336
        %v1349 = vpack.c.b16 %v1339, %v1338
        %v1350 = vpack.c.b16 %v1341, %v1340
        %v1351 = vpack.c.b16 %v1343, %v1342
        %1360 = vmatpush.bf16.msra.mxu0 %v1351
        %1361 = vmatpush.bf16.msra.mxu0 %v1350
        %1362 = vmatpush.bf16.msra.mxu0 %v1349
        %1363 = vmatpush.bf16.msra.mxu0 %v1348
        %1364 = vmatpush.bf16.msra.mxu0 %v1347
        %1365 = vmatpush.bf16.msra.mxu0 %v1346
        %1366 = vmatpush.bf16.msra.mxu0 %v1345
        %1367 = vmatpush.bf16.msra.mxu0 %v1344
        %1368 = vmatmul.bf16.gmra.mxu0 %v1134
        %v1369 = vpop.f32.mrf.mxu0
        %v1370 = vadd.f32 0.0, %v1369
        %v1371 = vpop.f32.mrf.mxu0
        %v1372 = vadd.f32 0.0, %v1371
        %1373 = vdwg.mxu0
        %v1374 = vrot.slane %v1246, 7
        %v1375 = vrot.slane %v1248, 7
        %v1376 = vsel %vm575, %v1374, %v1375
        %v1377 = vsel %vm575, %v1375, %v1374
        %v1378 = vsel %vm415, %v1377, 0.0
        %v1379 = vsel %vm416, %v1376, 0.0
        %v1380 = vadd.f32 %v1378, %v1308
        %v1381 = vadd.f32 %v1379, %v1310
        %v1383 = vperm.slane %v1187, 0
        %v1385 = vadd.f32 %v1380, %v1383
        %v1386 = vadd.f32 %v1381, %v1383
        %v1387 = vrot.slane %v1370, 1
        %v1388 = vrot.slane %v1372, 1
        %v1389 = vsel %vm589, %v1387, %v1388
        %v1390 = vsel %vm589, %v1388, %v1387
        %v1391 = vsel %vm419, %v1389, 0.0
        %v1392 = vsel %vm420, %v1390, 0.0
        %v1393 = vadd.f32 %v1385, %v1391
        %v1394 = vadd.f32 %v1386, %v1392
        %vm1395 = vcmp.gt.f32.partialorder %v1393, 0.0
        %vm1396 = vcmp.gt.f32.partialorder %v1394, 0.0
        %v1397 = vmul.f32 %v1393, 0.01
        %v1398 = vmul.f32 %v1394, 0.01
        %v1399 = vsel %vm1395, %v1393, %v1397
        %v1400 = vsel %vm1396, %v1394, %v1398
        %v1401 = vpack.c.bf16 %v1400, %v1399
        %s1402 = scalar_lea.vmem [#allocation8], 576
        %v1403 = vld [vmem:[%s1402] sm:$0xf]
        %v1404 = vld [vmem:[%s1402 + $0x4] sm:$0xf]
        %v1405 = vld [vmem:[%s1402 + $0x8] sm:$0xf]
        %v1406 = vld [vmem:[%s1402 + $0xc] sm:$0xf]
        %v1407 = vld [vmem:[%s1402 + $0x10] sm:$0xf]
        %v1408 = vld [vmem:[%s1402 + $0x14] sm:$0xf]
        %v1409 = vld [vmem:[%s1402 + $0x18] sm:$0xf]
        %v1410 = vld [vmem:[%s1402 + $0x1c] sm:$0xf]
        %v1411 = vld [vmem:[%s1402 + $0x20] sm:$0xf]
        %v1412 = vld [vmem:[%s1402 + $0x24] sm:$0xf]
        %v1413 = vld [vmem:[%s1402 + $0x28] sm:$0xf]
        %v1414 = vld [vmem:[%s1402 + $0x2c] sm:$0xf]
        %v1415 = vld [vmem:[%s1402 + $0x30] sm:$0xf]
        %v1416 = vld [vmem:[%s1402 + $0x34] sm:$0xf]
        %v1417 = vld [vmem:[%s1402 + $0x38] sm:$0xf]
        %v1418 = vld [vmem:[%s1402 + $0x3c] sm:$0xf]
        %s1419 = scalar_lea.vmem [#allocation8], 640
        %v1420 = vld [vmem:[%s1419] sm:$0xf]
        %v1421 = vld [vmem:[%s1419 + $0x4] sm:$0xf]
        %v1422 = vld [vmem:[%s1419 + $0x8] sm:$0xf]
        %v1423 = vld [vmem:[%s1419 + $0xc] sm:$0xf]
        %v1424 = vld [vmem:[%s1419 + $0x10] sm:$0xf]
        %v1425 = vld [vmem:[%s1419 + $0x14] sm:$0xf]
        %v1426 = vld [vmem:[%s1419 + $0x18] sm:$0xf]
        %v1427 = vld [vmem:[%s1419 + $0x1c] sm:$0xf]
        %v1428 = vld [vmem:[%s1419 + $0x20] sm:$0xf]
        %v1429 = vld [vmem:[%s1419 + $0x24] sm:$0xf]
        %v1430 = vld [vmem:[%s1419 + $0x28] sm:$0xf]
        %v1431 = vld [vmem:[%s1419 + $0x2c] sm:$0xf]
        %v1432 = vld [vmem:[%s1419 + $0x30] sm:$0xf]
        %v1433 = vld [vmem:[%s1419 + $0x34] sm:$0xf]
        %v1434 = vld [vmem:[%s1419 + $0x38] sm:$0xf]
        %v1435 = vld [vmem:[%s1419 + $0x3c] sm:$0xf]
        %s1436 = scalar_lea.vmem [#allocation8], 704
        %v1437 = vld [vmem:[%s1436] sm:$0xf]
        %v1438 = vld [vmem:[%s1436 + $0x4] sm:$0xf]
        %v1439 = vld [vmem:[%s1436 + $0x8] sm:$0xf]
        %v1440 = vld [vmem:[%s1436 + $0xc] sm:$0xf]
        %v1441 = vld [vmem:[%s1436 + $0x10] sm:$0xf]
        %v1442 = vld [vmem:[%s1436 + $0x14] sm:$0xf]
        %v1443 = vld [vmem:[%s1436 + $0x18] sm:$0xf]
        %v1444 = vld [vmem:[%s1436 + $0x1c] sm:$0xf]
        %v1445 = vld [vmem:[%s1436 + $0x20] sm:$0xf]
        %v1446 = vld [vmem:[%s1436 + $0x24] sm:$0xf]
        %v1447 = vld [vmem:[%s1436 + $0x28] sm:$0xf]
        %v1448 = vld [vmem:[%s1436 + $0x2c] sm:$0xf]
        %v1449 = vld [vmem:[%s1436 + $0x30] sm:$0xf]
        %v1450 = vld [vmem:[%s1436 + $0x34] sm:$0xf]
        %v1451 = vld [vmem:[%s1436 + $0x38] sm:$0xf]
        %v1452 = vld [vmem:[%s1436 + $0x3c] sm:$0xf]
        %s1453 = scalar_lea.vmem [#allocation10], 3
        %v1454 = vld [vmem:[%s1453] sm:$0x1]
        %v1471 = vunpack.c.l.b16 %v1403
        %v1472 = vunpack.c.l.b16 %v1404
        %v1473 = vunpack.c.l.b16 %v1405
        %v1474 = vunpack.c.l.b16 %v1406
        %v1475 = vunpack.c.l.b16 %v1407
        %v1476 = vunpack.c.l.b16 %v1408
        %v1477 = vunpack.c.l.b16 %v1409
        %v1478 = vunpack.c.l.b16 %v1410
        %v1479 = vunpack.c.l.b16 %v1411
        %v1480 = vunpack.c.l.b16 %v1412
        %v1481 = vunpack.c.l.b16 %v1413
        %v1482 = vunpack.c.l.b16 %v1414
        %v1483 = vunpack.c.l.b16 %v1415
        %v1484 = vunpack.c.l.b16 %v1416
        %v1485 = vunpack.c.l.b16 %v1417
        %v1486 = vunpack.c.l.b16 %v1418
        %v1487 = vpack.c.b16 %v1472, %v1471
        %v1488 = vpack.c.b16 %v1474, %v1473
        %v1489 = vpack.c.b16 %v1476, %v1475
        %v1490 = vpack.c.b16 %v1478, %v1477
        %v1491 = vpack.c.b16 %v1480, %v1479
        %v1492 = vpack.c.b16 %v1482, %v1481
        %v1493 = vpack.c.b16 %v1484, %v1483
        %v1494 = vpack.c.b16 %v1486, %v1485
        %1503 = vmatpush.bf16.msra.mxu0 %v1494
        %1504 = vmatpush.bf16.msra.mxu0 %v1493
        %1505 = vmatpush.bf16.msra.mxu0 %v1492
        %1506 = vmatpush.bf16.msra.mxu0 %v1491
        %1507 = vmatpush.bf16.msra.mxu0 %v1490
        %1508 = vmatpush.bf16.msra.mxu0 %v1489
        %1509 = vmatpush.bf16.msra.mxu0 %v1488
        %1510 = vmatpush.bf16.msra.mxu0 %v1487
        %1511 = vmatmul.bf16.gmra.mxu0 %v1401
        %v1512 = vpop.f32.mrf.mxu0
        %v1513 = vadd.f32 0.0, %v1512
        %v1514 = vpop.f32.mrf.mxu0
        %v1515 = vadd.f32 0.0, %v1514
        %1516 = vdwg.mxu0
        %v1533 = vunpack.c.l.b16 %v1420
        %v1534 = vunpack.c.l.b16 %v1421
        %v1535 = vunpack.c.l.b16 %v1422
        %v1536 = vunpack.c.l.b16 %v1423
        %v1537 = vunpack.c.l.b16 %v1424
        %v1538 = vunpack.c.l.b16 %v1425
        %v1539 = vunpack.c.l.b16 %v1426
        %v1540 = vunpack.c.l.b16 %v1427
        %v1541 = vunpack.c.l.b16 %v1428
        %v1542 = vunpack.c.l.b16 %v1429
        %v1543 = vunpack.c.l.b16 %v1430
        %v1544 = vunpack.c.l.b16 %v1431
        %v1545 = vunpack.c.l.b16 %v1432
        %v1546 = vunpack.c.l.b16 %v1433
        %v1547 = vunpack.c.l.b16 %v1434
        %v1548 = vunpack.c.l.b16 %v1435
        %v1549 = vpack.c.b16 %v1534, %v1533
        %v1550 = vpack.c.b16 %v1536, %v1535
        %v1551 = vpack.c.b16 %v1538, %v1537
        %v1552 = vpack.c.b16 %v1540, %v1539
        %v1553 = vpack.c.b16 %v1542, %v1541
        %v1554 = vpack.c.b16 %v1544, %v1543
        %v1555 = vpack.c.b16 %v1546, %v1545
        %v1556 = vpack.c.b16 %v1548, %v1547
        %1565 = vmatpush.bf16.msra.mxu0 %v1556
        %1566 = vmatpush.bf16.msra.mxu0 %v1555
        %1567 = vmatpush.bf16.msra.mxu0 %v1554
        %1568 = vmatpush.bf16.msra.mxu0 %v1553
        %1569 = vmatpush.bf16.msra.mxu0 %v1552
        %1570 = vmatpush.bf16.msra.mxu0 %v1551
        %1571 = vmatpush.bf16.msra.mxu0 %v1550
        %1572 = vmatpush.bf16.msra.mxu0 %v1549
        %1573 = vmatmul.bf16.gmra.mxu0 %v1401
        %v1574 = vpop.f32.mrf.mxu0
        %v1575 = vadd.f32 0.0, %v1574
        %v1576 = vpop.f32.mrf.mxu0
        %v1577 = vadd.f32 0.0, %v1576
        %1578 = vdwg.mxu0
        %v1595 = vunpack.c.l.b16 %v1437
        %v1596 = vunpack.c.l.b16 %v1438
        %v1597 = vunpack.c.l.b16 %v1439
        %v1598 = vunpack.c.l.b16 %v1440
        %v1599 = vunpack.c.l.b16 %v1441
        %v1600 = vunpack.c.l.b16 %v1442
        %v1601 = vunpack.c.l.b16 %v1443
        %v1602 = vunpack.c.l.b16 %v1444
        %v1603 = vunpack.c.l.b16 %v1445
        %v1604 = vunpack.c.l.b16 %v1446
        %v1605 = vunpack.c.l.b16 %v1447
        %v1606 = vunpack.c.l.b16 %v1448
        %v1607 = vunpack.c.l.b16 %v1449
        %v1608 = vunpack.c.l.b16 %v1450
        %v1609 = vunpack.c.l.b16 %v1451
        %v1610 = vunpack.c.l.b16 %v1452
        %v1611 = vpack.c.b16 %v1596, %v1595
        %v1612 = vpack.c.b16 %v1598, %v1597
        %v1613 = vpack.c.b16 %v1600, %v1599
        %v1614 = vpack.c.b16 %v1602, %v1601
        %v1615 = vpack.c.b16 %v1604, %v1603
        %v1616 = vpack.c.b16 %v1606, %v1605
        %v1617 = vpack.c.b16 %v1608, %v1607
        %v1618 = vpack.c.b16 %v1610, %v1609
        %1627 = vmatpush.bf16.msra.mxu0 %v1618
        %1628 = vmatpush.bf16.msra.mxu0 %v1617
        %1629 = vmatpush.bf16.msra.mxu0 %v1616
        %1630 = vmatpush.bf16.msra.mxu0 %v1615
        %1631 = vmatpush.bf16.msra.mxu0 %v1614
        %1632 = vmatpush.bf16.msra.mxu0 %v1613
        %1633 = vmatpush.bf16.msra.mxu0 %v1612
        %1634 = vmatpush.bf16.msra.mxu0 %v1611
        %1635 = vmatmul.bf16.gmra.mxu0 %v1401
        %v1636 = vpop.f32.mrf.mxu0
        %v1637 = vadd.f32 0.0, %v1636
        %v1638 = vpop.f32.mrf.mxu0
        %v1639 = vadd.f32 0.0, %v1638
        %1640 = vdwg.mxu0
        %v1641 = vrot.slane %v1513, 7
        %v1642 = vrot.slane %v1515, 7
        %v1643 = vsel %vm575, %v1641, %v1642
        %v1644 = vsel %vm575, %v1642, %v1641
        %v1645 = vsel %vm415, %v1644, 0.0
        %v1646 = vsel %vm416, %v1643, 0.0
        %v1647 = vadd.f32 %v1645, %v1575
        %v1648 = vadd.f32 %v1646, %v1577
        %v1650 = vperm.slane %v1454, 0
        %v1652 = vadd.f32 %v1647, %v1650
        %v1653 = vadd.f32 %v1648, %v1650
        %v1654 = vrot.slane %v1637, 1
        %v1655 = vrot.slane %v1639, 1
        %v1656 = vsel %vm589, %v1654, %v1655
        %v1657 = vsel %vm589, %v1655, %v1654
        %v1658 = vsel %vm419, %v1656, 0.0
        %v1659 = vsel %vm420, %v1657, 0.0
        %v1660 = vadd.f32 %v1652, %v1658
        %v1661 = vadd.f32 %v1653, %v1659
        %vm1662 = vcmp.gt.f32.partialorder %v1660, 0.0
        %vm1663 = vcmp.gt.f32.partialorder %v1661, 0.0
        %v1664 = vmul.f32 %v1660, 0.01
        %v1665 = vmul.f32 %v1661, 0.01
        %v1666 = vsel %vm1662, %v1660, %v1664
        %v1667 = vsel %vm1663, %v1661, %v1665
        %v1668 = vpack.c.bf16 %v1667, %v1666
        %s1669 = scalar_lea.vmem [#allocation8], 768
        %v1670 = vld [vmem:[%s1669] sm:$0xf]
        %v1671 = vld [vmem:[%s1669 + $0x4] sm:$0xf]
        %v1672 = vld [vmem:[%s1669 + $0x8] sm:$0xf]
        %v1673 = vld [vmem:[%s1669 + $0xc] sm:$0xf]
        %v1674 = vld [vmem:[%s1669 + $0x10] sm:$0xf]
        %v1675 = vld [vmem:[%s1669 + $0x14] sm:$0xf]
        %v1676 = vld [vmem:[%s1669 + $0x18] sm:$0xf]
        %v1677 = vld [vmem:[%s1669 + $0x1c] sm:$0xf]
        %v1678 = vld [vmem:[%s1669 + $0x20] sm:$0xf]
        %v1679 = vld [vmem:[%s1669 + $0x24] sm:$0xf]
        %v1680 = vld [vmem:[%s1669 + $0x28] sm:$0xf]
        %v1681 = vld [vmem:[%s1669 + $0x2c] sm:$0xf]
        %v1682 = vld [vmem:[%s1669 + $0x30] sm:$0xf]
        %v1683 = vld [vmem:[%s1669 + $0x34] sm:$0xf]
        %v1684 = vld [vmem:[%s1669 + $0x38] sm:$0xf]
        %v1685 = vld [vmem:[%s1669 + $0x3c] sm:$0xf]
        %s1686 = scalar_lea.vmem [#allocation8], 832
        %v1687 = vld [vmem:[%s1686] sm:$0xf]
        %v1688 = vld [vmem:[%s1686 + $0x4] sm:$0xf]
        %v1689 = vld [vmem:[%s1686 + $0x8] sm:$0xf]
        %v1690 = vld [vmem:[%s1686 + $0xc] sm:$0xf]
        %v1691 = vld [vmem:[%s1686 + $0x10] sm:$0xf]
        %v1692 = vld [vmem:[%s1686 + $0x14] sm:$0xf]
        %v1693 = vld [vmem:[%s1686 + $0x18] sm:$0xf]
        %v1694 = vld [vmem:[%s1686 + $0x1c] sm:$0xf]
        %v1695 = vld [vmem:[%s1686 + $0x20] sm:$0xf]
        %v1696 = vld [vmem:[%s1686 + $0x24] sm:$0xf]
        %v1697 = vld [vmem:[%s1686 + $0x28] sm:$0xf]
        %v1698 = vld [vmem:[%s1686 + $0x2c] sm:$0xf]
        %v1699 = vld [vmem:[%s1686 + $0x30] sm:$0xf]
        %v1700 = vld [vmem:[%s1686 + $0x34] sm:$0xf]
        %v1701 = vld [vmem:[%s1686 + $0x38] sm:$0xf]
        %v1702 = vld [vmem:[%s1686 + $0x3c] sm:$0xf]
        %s1703 = scalar_lea.vmem [#allocation8], 896
        %v1704 = vld [vmem:[%s1703] sm:$0xf]
        %v1705 = vld [vmem:[%s1703 + $0x4] sm:$0xf]
        %v1706 = vld [vmem:[%s1703 + $0x8] sm:$0xf]
        %v1707 = vld [vmem:[%s1703 + $0xc] sm:$0xf]
        %v1708 = vld [vmem:[%s1703 + $0x10] sm:$0xf]
        %v1709 = vld [vmem:[%s1703 + $0x14] sm:$0xf]
        %v1710 = vld [vmem:[%s1703 + $0x18] sm:$0xf]
        %v1711 = vld [vmem:[%s1703 + $0x1c] sm:$0xf]
        %v1712 = vld [vmem:[%s1703 + $0x20] sm:$0xf]
        %v1713 = vld [vmem:[%s1703 + $0x24] sm:$0xf]
        %v1714 = vld [vmem:[%s1703 + $0x28] sm:$0xf]
        %v1715 = vld [vmem:[%s1703 + $0x2c] sm:$0xf]
        %v1716 = vld [vmem:[%s1703 + $0x30] sm:$0xf]
        %v1717 = vld [vmem:[%s1703 + $0x34] sm:$0xf]
        %v1718 = vld [vmem:[%s1703 + $0x38] sm:$0xf]
        %v1719 = vld [vmem:[%s1703 + $0x3c] sm:$0xf]
        %s1720 = scalar_lea.vmem [#allocation10], 4
        %v1721 = vld [vmem:[%s1720] sm:$0x1]
        %v1738 = vunpack.c.l.b16 %v1670
        %v1739 = vunpack.c.l.b16 %v1671
        %v1740 = vunpack.c.l.b16 %v1672
        %v1741 = vunpack.c.l.b16 %v1673
        %v1742 = vunpack.c.l.b16 %v1674
        %v1743 = vunpack.c.l.b16 %v1675
        %v1744 = vunpack.c.l.b16 %v1676
        %v1745 = vunpack.c.l.b16 %v1677
        %v1746 = vunpack.c.l.b16 %v1678
        %v1747 = vunpack.c.l.b16 %v1679
        %v1748 = vunpack.c.l.b16 %v1680
        %v1749 = vunpack.c.l.b16 %v1681
        %v1750 = vunpack.c.l.b16 %v1682
        %v1751 = vunpack.c.l.b16 %v1683
        %v1752 = vunpack.c.l.b16 %v1684
        %v1753 = vunpack.c.l.b16 %v1685
        %v1754 = vpack.c.b16 %v1739, %v1738
        %v1755 = vpack.c.b16 %v1741, %v1740
        %v1756 = vpack.c.b16 %v1743, %v1742
        %v1757 = vpack.c.b16 %v1745, %v1744
        %v1758 = vpack.c.b16 %v1747, %v1746
        %v1759 = vpack.c.b16 %v1749, %v1748
        %v1760 = vpack.c.b16 %v1751, %v1750
        %v1761 = vpack.c.b16 %v1753, %v1752
        %1770 = vmatpush.bf16.msra.mxu0 %v1761
        %1771 = vmatpush.bf16.msra.mxu0 %v1760
        %1772 = vmatpush.bf16.msra.mxu0 %v1759
        %1773 = vmatpush.bf16.msra.mxu0 %v1758
        %1774 = vmatpush.bf16.msra.mxu0 %v1757
        %1775 = vmatpush.bf16.msra.mxu0 %v1756
        %1776 = vmatpush.bf16.msra.mxu0 %v1755
        %1777 = vmatpush.bf16.msra.mxu0 %v1754
        %1778 = vmatmul.bf16.gmra.mxu0 %v1668
        %v1779 = vpop.f32.mrf.mxu0
        %v1780 = vadd.f32 0.0, %v1779
        %v1781 = vpop.f32.mrf.mxu0
        %v1782 = vadd.f32 0.0, %v1781
        %1783 = vdwg.mxu0
        %v1800 = vunpack.c.l.b16 %v1687
        %v1801 = vunpack.c.l.b16 %v1688
        %v1802 = vunpack.c.l.b16 %v1689
        %v1803 = vunpack.c.l.b16 %v1690
        %v1804 = vunpack.c.l.b16 %v1691
        %v1805 = vunpack.c.l.b16 %v1692
        %v1806 = vunpack.c.l.b16 %v1693
        %v1807 = vunpack.c.l.b16 %v1694
        %v1808 = vunpack.c.l.b16 %v1695
        %v1809 = vunpack.c.l.b16 %v1696
        %v1810 = vunpack.c.l.b16 %v1697
        %v1811 = vunpack.c.l.b16 %v1698
        %v1812 = vunpack.c.l.b16 %v1699
        %v1813 = vunpack.c.l.b16 %v1700
        %v1814 = vunpack.c.l.b16 %v1701
        %v1815 = vunpack.c.l.b16 %v1702
        %v1816 = vpack.c.b16 %v1801, %v1800
        %v1817 = vpack.c.b16 %v1803, %v1802
        %v1818 = vpack.c.b16 %v1805, %v1804
        %v1819 = vpack.c.b16 %v1807, %v1806
        %v1820 = vpack.c.b16 %v1809, %v1808
        %v1821 = vpack.c.b16 %v1811, %v1810
        %v1822 = vpack.c.b16 %v1813, %v1812
        %v1823 = vpack.c.b16 %v1815, %v1814
        %1832 = vmatpush.bf16.msra.mxu0 %v1823
        %1833 = vmatpush.bf16.msra.mxu0 %v1822
        %1834 = vmatpush.bf16.msra.mxu0 %v1821
        %1835 = vmatpush.bf16.msra.mxu0 %v1820
        %1836 = vmatpush.bf16.msra.mxu0 %v1819
        %1837 = vmatpush.bf16.msra.mxu0 %v1818
        %1838 = vmatpush.bf16.msra.mxu0 %v1817
        %1839 = vmatpush.bf16.msra.mxu0 %v1816
        %1840 = vmatmul.bf16.gmra.mxu0 %v1668
        %v1841 = vpop.f32.mrf.mxu0
        %v1842 = vadd.f32 0.0, %v1841
        %v1843 = vpop.f32.mrf.mxu0
        %v1844 = vadd.f32 0.0, %v1843
        %1845 = vdwg.mxu0
        %v1862 = vunpack.c.l.b16 %v1704
        %v1863 = vunpack.c.l.b16 %v1705
        %v1864 = vunpack.c.l.b16 %v1706
        %v1865 = vunpack.c.l.b16 %v1707
        %v1866 = vunpack.c.l.b16 %v1708
        %v1867 = vunpack.c.l.b16 %v1709
        %v1868 = vunpack.c.l.b16 %v1710
        %v1869 = vunpack.c.l.b16 %v1711
        %v1870 = vunpack.c.l.b16 %v1712
        %v1871 = vunpack.c.l.b16 %v1713
        %v1872 = vunpack.c.l.b16 %v1714
        %v1873 = vunpack.c.l.b16 %v1715
        %v1874 = vunpack.c.l.b16 %v1716
        %v1875 = vunpack.c.l.b16 %v1717
        %v1876 = vunpack.c.l.b16 %v1718
        %v1877 = vunpack.c.l.b16 %v1719
        %v1878 = vpack.c.b16 %v1863, %v1862
        %v1879 = vpack.c.b16 %v1865, %v1864
        %v1880 = vpack.c.b16 %v1867, %v1866
        %v1881 = vpack.c.b16 %v1869, %v1868
        %v1882 = vpack.c.b16 %v1871, %v1870
        %v1883 = vpack.c.b16 %v1873, %v1872
        %v1884 = vpack.c.b16 %v1875, %v1874
        %v1885 = vpack.c.b16 %v1877, %v1876
        %1894 = vmatpush.bf16.msra.mxu0 %v1885
        %1895 = vmatpush.bf16.msra.mxu0 %v1884
        %1896 = vmatpush.bf16.msra.mxu0 %v1883
        %1897 = vmatpush.bf16.msra.mxu0 %v1882
        %1898 = vmatpush.bf16.msra.mxu0 %v1881
        %1899 = vmatpush.bf16.msra.mxu0 %v1880
        %1900 = vmatpush.bf16.msra.mxu0 %v1879
        %1901 = vmatpush.bf16.msra.mxu0 %v1878
        %1902 = vmatmul.bf16.gmra.mxu0 %v1668
        %v1903 = vpop.f32.mrf.mxu0
        %v1904 = vadd.f32 0.0, %v1903
        %v1905 = vpop.f32.mrf.mxu0
        %v1906 = vadd.f32 0.0, %v1905
        %1907 = vdwg.mxu0
        %v1908 = vrot.slane %v1780, 7
        %v1909 = vrot.slane %v1782, 7
        %v1910 = vsel %vm575, %v1908, %v1909
        %v1911 = vsel %vm575, %v1909, %v1908
        %v1912 = vsel %vm415, %v1911, 0.0
        %v1913 = vsel %vm416, %v1910, 0.0
        %v1914 = vadd.f32 %v1912, %v1842
        %v1915 = vadd.f32 %v1913, %v1844
        %v1917 = vperm.slane %v1721, 0
        %v1919 = vadd.f32 %v1914, %v1917
        %v1920 = vadd.f32 %v1915, %v1917
        %v1921 = vrot.slane %v1904, 1
        %v1922 = vrot.slane %v1906, 1
        %v1923 = vsel %vm589, %v1921, %v1922
        %v1924 = vsel %vm589, %v1922, %v1921
        %v1925 = vsel %vm419, %v1923, 0.0
        %v1926 = vsel %vm420, %v1924, 0.0
        %v1927 = vadd.f32 %v1919, %v1925
        %v1928 = vadd.f32 %v1920, %v1926
        %vm1929 = vcmp.gt.f32.partialorder %v1927, 0.0
        %vm1930 = vcmp.gt.f32.partialorder %v1928, 0.0
        %v1931 = vmul.f32 %v1927, 0.01
        %v1932 = vmul.f32 %v1928, 0.01
        %v1933 = vsel %vm1929, %v1927, %v1931
        %v1934 = vsel %vm1930, %v1928, %v1932
        %v1935 = vpack.c.bf16 %v1934, %v1933
        %s1936 = scalar_lea.vmem [#allocation8], 960
        %v1937 = vld [vmem:[%s1936] sm:$0xf]
        %v1938 = vld [vmem:[%s1936 + $0x4] sm:$0xf]
        %v1939 = vld [vmem:[%s1936 + $0x8] sm:$0xf]
        %v1940 = vld [vmem:[%s1936 + $0xc] sm:$0xf]
        %v1941 = vld [vmem:[%s1936 + $0x10] sm:$0xf]
        %v1942 = vld [vmem:[%s1936 + $0x14] sm:$0xf]
        %v1943 = vld [vmem:[%s1936 + $0x18] sm:$0xf]
        %v1944 = vld [vmem:[%s1936 + $0x1c] sm:$0xf]
        %v1945 = vld [vmem:[%s1936 + $0x20] sm:$0xf]
        %v1946 = vld [vmem:[%s1936 + $0x24] sm:$0xf]
        %v1947 = vld [vmem:[%s1936 + $0x28] sm:$0xf]
        %v1948 = vld [vmem:[%s1936 + $0x2c] sm:$0xf]
        %v1949 = vld [vmem:[%s1936 + $0x30] sm:$0xf]
        %v1950 = vld [vmem:[%s1936 + $0x34] sm:$0xf]
        %v1951 = vld [vmem:[%s1936 + $0x38] sm:$0xf]
        %v1952 = vld [vmem:[%s1936 + $0x3c] sm:$0xf]
        %s1953 = scalar_lea.vmem [#allocation8], 1024
        %v1954 = vld [vmem:[%s1953] sm:$0xf]
        %v1955 = vld [vmem:[%s1953 + $0x4] sm:$0xf]
        %v1956 = vld [vmem:[%s1953 + $0x8] sm:$0xf]
        %v1957 = vld [vmem:[%s1953 + $0xc] sm:$0xf]
        %v1958 = vld [vmem:[%s1953 + $0x10] sm:$0xf]
        %v1959 = vld [vmem:[%s1953 + $0x14] sm:$0xf]
        %v1960 = vld [vmem:[%s1953 + $0x18] sm:$0xf]
        %v1961 = vld [vmem:[%s1953 + $0x1c] sm:$0xf]
        %v1962 = vld [vmem:[%s1953 + $0x20] sm:$0xf]
        %v1963 = vld [vmem:[%s1953 + $0x24] sm:$0xf]
        %v1964 = vld [vmem:[%s1953 + $0x28] sm:$0xf]
        %v1965 = vld [vmem:[%s1953 + $0x2c] sm:$0xf]
        %v1966 = vld [vmem:[%s1953 + $0x30] sm:$0xf]
        %v1967 = vld [vmem:[%s1953 + $0x34] sm:$0xf]
        %v1968 = vld [vmem:[%s1953 + $0x38] sm:$0xf]
        %v1969 = vld [vmem:[%s1953 + $0x3c] sm:$0xf]
        %s1970 = scalar_lea.vmem [#allocation8], 1088
        %v1971 = vld [vmem:[%s1970] sm:$0xf]
        %v1972 = vld [vmem:[%s1970 + $0x4] sm:$0xf]
        %v1973 = vld [vmem:[%s1970 + $0x8] sm:$0xf]
        %v1974 = vld [vmem:[%s1970 + $0xc] sm:$0xf]
        %v1975 = vld [vmem:[%s1970 + $0x10] sm:$0xf]
        %v1976 = vld [vmem:[%s1970 + $0x14] sm:$0xf]
        %v1977 = vld [vmem:[%s1970 + $0x18] sm:$0xf]
        %v1978 = vld [vmem:[%s1970 + $0x1c] sm:$0xf]
        %v1979 = vld [vmem:[%s1970 + $0x20] sm:$0xf]
        %v1980 = vld [vmem:[%s1970 + $0x24] sm:$0xf]
        %v1981 = vld [vmem:[%s1970 + $0x28] sm:$0xf]
        %v1982 = vld [vmem:[%s1970 + $0x2c] sm:$0xf]
        %v1983 = vld [vmem:[%s1970 + $0x30] sm:$0xf]
        %v1984 = vld [vmem:[%s1970 + $0x34] sm:$0xf]
        %v1985 = vld [vmem:[%s1970 + $0x38] sm:$0xf]
        %v1986 = vld [vmem:[%s1970 + $0x3c] sm:$0xf]
        %s1987 = scalar_lea.vmem [#allocation10], 5
        %v1988 = vld [vmem:[%s1987] sm:$0x1]
        %v2005 = vunpack.c.l.b16 %v1937
        %v2006 = vunpack.c.l.b16 %v1938
        %v2007 = vunpack.c.l.b16 %v1939
        %v2008 = vunpack.c.l.b16 %v1940
        %v2009 = vunpack.c.l.b16 %v1941
        %v2010 = vunpack.c.l.b16 %v1942
        %v2011 = vunpack.c.l.b16 %v1943
        %v2012 = vunpack.c.l.b16 %v1944
        %v2013 = vunpack.c.l.b16 %v1945
        %v2014 = vunpack.c.l.b16 %v1946
        %v2015 = vunpack.c.l.b16 %v1947
        %v2016 = vunpack.c.l.b16 %v1948
        %v2017 = vunpack.c.l.b16 %v1949
        %v2018 = vunpack.c.l.b16 %v1950
        %v2019 = vunpack.c.l.b16 %v1951
        %v2020 = vunpack.c.l.b16 %v1952
        %v2021 = vpack.c.b16 %v2006, %v2005
        %v2022 = vpack.c.b16 %v2008, %v2007
        %v2023 = vpack.c.b16 %v2010, %v2009
        %v2024 = vpack.c.b16 %v2012, %v2011
        %v2025 = vpack.c.b16 %v2014, %v2013
        %v2026 = vpack.c.b16 %v2016, %v2015
        %v2027 = vpack.c.b16 %v2018, %v2017
        %v2028 = vpack.c.b16 %v2020, %v2019
        %2037 = vmatpush.bf16.msra.mxu0 %v2028
        %2038 = vmatpush.bf16.msra.mxu0 %v2027
        %2039 = vmatpush.bf16.msra.mxu0 %v2026
        %2040 = vmatpush.bf16.msra.mxu0 %v2025
        %2041 = vmatpush.bf16.msra.mxu0 %v2024
        %2042 = vmatpush.bf16.msra.mxu0 %v2023
        %2043 = vmatpush.bf16.msra.mxu0 %v2022
        %2044 = vmatpush.bf16.msra.mxu0 %v2021
        %2045 = vmatmul.bf16.gmra.mxu0 %v1935
        %v2046 = vpop.f32.mrf.mxu0
        %v2047 = vadd.f32 0.0, %v2046
        %v2048 = vpop.f32.mrf.mxu0
        %v2049 = vadd.f32 0.0, %v2048
        %2050 = vdwg.mxu0
        %v2067 = vunpack.c.l.b16 %v1954
        %v2068 = vunpack.c.l.b16 %v1955
        %v2069 = vunpack.c.l.b16 %v1956
        %v2070 = vunpack.c.l.b16 %v1957
        %v2071 = vunpack.c.l.b16 %v1958
        %v2072 = vunpack.c.l.b16 %v1959
        %v2073 = vunpack.c.l.b16 %v1960
        %v2074 = vunpack.c.l.b16 %v1961
        %v2075 = vunpack.c.l.b16 %v1962
        %v2076 = vunpack.c.l.b16 %v1963
        %v2077 = vunpack.c.l.b16 %v1964
        %v2078 = vunpack.c.l.b16 %v1965
        %v2079 = vunpack.c.l.b16 %v1966
        %v2080 = vunpack.c.l.b16 %v1967
        %v2081 = vunpack.c.l.b16 %v1968
        %v2082 = vunpack.c.l.b16 %v1969
        %v2083 = vpack.c.b16 %v2068, %v2067
        %v2084 = vpack.c.b16 %v2070, %v2069
        %v2085 = vpack.c.b16 %v2072, %v2071
        %v2086 = vpack.c.b16 %v2074, %v2073
        %v2087 = vpack.c.b16 %v2076, %v2075
        %v2088 = vpack.c.b16 %v2078, %v2077
        %v2089 = vpack.c.b16 %v2080, %v2079
        %v2090 = vpack.c.b16 %v2082, %v2081
        %2099 = vmatpush.bf16.msra.mxu0 %v2090
        %2100 = vmatpush.bf16.msra.mxu0 %v2089
        %2101 = vmatpush.bf16.msra.mxu0 %v2088
        %2102 = vmatpush.bf16.msra.mxu0 %v2087
        %2103 = vmatpush.bf16.msra.mxu0 %v2086
        %2104 = vmatpush.bf16.msra.mxu0 %v2085
        %2105 = vmatpush.bf16.msra.mxu0 %v2084
        %2106 = vmatpush.bf16.msra.mxu0 %v2083
        %2107 = vmatmul.bf16.gmra.mxu0 %v1935
        %v2108 = vpop.f32.mrf.mxu0
        %v2109 = vadd.f32 0.0, %v2108
        %v2110 = vpop.f32.mrf.mxu0
        %v2111 = vadd.f32 0.0, %v2110
        %2112 = vdwg.mxu0
        %v2129 = vunpack.c.l.b16 %v1971
        %v2130 = vunpack.c.l.b16 %v1972
        %v2131 = vunpack.c.l.b16 %v1973
        %v2132 = vunpack.c.l.b16 %v1974
        %v2133 = vunpack.c.l.b16 %v1975
        %v2134 = vunpack.c.l.b16 %v1976
        %v2135 = vunpack.c.l.b16 %v1977
        %v2136 = vunpack.c.l.b16 %v1978
        %v2137 = vunpack.c.l.b16 %v1979
        %v2138 = vunpack.c.l.b16 %v1980
        %v2139 = vunpack.c.l.b16 %v1981
        %v2140 = vunpack.c.l.b16 %v1982
        %v2141 = vunpack.c.l.b16 %v1983
        %v2142 = vunpack.c.l.b16 %v1984
        %v2143 = vunpack.c.l.b16 %v1985
        %v2144 = vunpack.c.l.b16 %v1986
        %v2145 = vpack.c.b16 %v2130, %v2129
        %v2146 = vpack.c.b16 %v2132, %v2131
        %v2147 = vpack.c.b16 %v2134, %v2133
        %v2148 = vpack.c.b16 %v2136, %v2135
        %v2149 = vpack.c.b16 %v2138, %v2137
        %v2150 = vpack.c.b16 %v2140, %v2139
        %v2151 = vpack.c.b16 %v2142, %v2141
        %v2152 = vpack.c.b16 %v2144, %v2143
        %2161 = vmatpush.bf16.msra.mxu0 %v2152
        %2162 = vmatpush.bf16.msra.mxu0 %v2151
        %2163 = vmatpush.bf16.msra.mxu0 %v2150
        %2164 = vmatpush.bf16.msra.mxu0 %v2149
        %2165 = vmatpush.bf16.msra.mxu0 %v2148
        %2166 = vmatpush.bf16.msra.mxu0 %v2147
        %2167 = vmatpush.bf16.msra.mxu0 %v2146
        %2168 = vmatpush.bf16.msra.mxu0 %v2145
        %2169 = vmatmul.bf16.gmra.mxu0 %v1935
        %v2170 = vpop.f32.mrf.mxu0
        %v2171 = vadd.f32 0.0, %v2170
        %v2172 = vpop.f32.mrf.mxu0
        %v2173 = vadd.f32 0.0, %v2172
        %2174 = vdwg.mxu0
        %v2175 = vrot.slane %v2047, 7
        %v2176 = vrot.slane %v2049, 7
        %v2177 = vsel %vm575, %v2175, %v2176
        %v2178 = vsel %vm575, %v2176, %v2175
        %v2179 = vsel %vm415, %v2178, 0.0
        %v2180 = vsel %vm416, %v2177, 0.0
        %v2181 = vadd.f32 %v2179, %v2109
        %v2182 = vadd.f32 %v2180, %v2111
        %v2184 = vperm.slane %v1988, 0
        %v2186 = vadd.f32 %v2181, %v2184
        %v2187 = vadd.f32 %v2182, %v2184
        %v2188 = vrot.slane %v2171, 1
        %v2189 = vrot.slane %v2173, 1
        %v2190 = vsel %vm589, %v2188, %v2189
        %v2191 = vsel %vm589, %v2189, %v2188
        %v2192 = vsel %vm419, %v2190, 0.0
        %v2193 = vsel %vm420, %v2191, 0.0
        %v2194 = vadd.f32 %v2186, %v2192
        %v2195 = vadd.f32 %v2187, %v2193
        %vm2196 = vcmp.gt.f32.partialorder %v2194, 0.0
        %vm2197 = vcmp.gt.f32.partialorder %v2195, 0.0
        %v2198 = vmul.f32 %v2194, 0.01
        %v2199 = vmul.f32 %v2195, 0.01
        %v2200 = vsel %vm2196, %v2194, %v2198
        %v2201 = vsel %vm2197, %v2195, %v2199
        %v2202 = vld [vmem:[%s5] sm:$0x7]
        %v2203 = vrot.slane %v2200, 7
        %v2204 = vrot.slane %v2201, 7
        %v2205 = vsel %vm575, %v2203, %v2204
        %v2206 = vsel %vm575, %v2204, %v2203
        %v2207 = vsel %vm415, %v2206, 0.0
        %v2208 = vsel %vm416, %v2205, 0.0
        %v2209 = vrot.slane %v2200, 1
        %v2210 = vrot.slane %v2201, 1
        %v2211 = vsel %vm589, %v2209, %v2210
        %v2212 = vsel %vm589, %v2210, %v2209
        %v2213 = vsel %vm419, %v2211, 0.0
        %v2214 = vsel %vm420, %v2212, 0.0
        %v2215 = vperm.slane %v2202, 0
        %v2216 = vmul.f32 %v2207, %v2215
        %v2217 = vmul.f32 %v2208, %v2215
        %v2218 = vperm.slane %v2202, 1
        %v2219 = vmul.f32 %v2200, %v2218
        %v2220 = vmul.f32 %v2201, %v2218
        %v2221 = vadd.f32 %v2216, %v2219
        %v2222 = vadd.f32 %v2217, %v2220
        %v2223 = vperm.slane %v2202, 2
        %v2224 = vmul.f32 %v2213, %v2223
        %v2225 = vmul.f32 %v2214, %v2223
        %v2226 = vadd.f32 %v2221, %v2224
        %v2227 = vadd.f32 %v2222, %v2225
        %2228 = vadd.xlane.f32.xlu0 %v2226
        %v2229 = vpop.xlane.xlu0 %2228
        %2230 = vadd.xlane.f32.xlu0 %v2227
        %v2231 = vpop.xlane.xlu0 %2230
        %s2232 = sld [smem:[#allocation11]]
        %s2233 = sld [smem:[#allocation11 + $0x1]]
        %s2234 = sld [smem:[#allocation11 + $0x2]]
        %v2235 = vstv %s2232
        %v2236 = vadd.f32 %v2229, %v2235
        %v2237 = vadd.f32 %v2231, %v2235
        %v2238 = vstv %s2233
        %v2239 = vmul.f32 %v2236, %v2238
        %v2240 = vmul.f32 %v2237, %v2238
        %v2241 = vstv %s2234
        %v2242 = vadd.f32 %v2239, %v2241
        %v2243 = vadd.f32 %v2240, %v2241
        %vm2244 = vcmask 7168
        %2245 = vst.msk [vmem:[%s379] sm:$0xff] %vm2244, %v2242
        %2246 = vst.msk [vmem:[%s379 + $0x8] sm:$0xff] %vm2244, %v2243
        %s2247 = smul.u32 2, %s24
        %p2248 = scmp.lt.s32.totalorder %s2247, 3
        %s2249 = scalar_select %p2248, %s2247, 3
        %s2250 = smul.addr %s2249, 8
        %s2251 = scalar_lea.vmem %s7, %s2250
        // Predicated region
        $region73: #{tpu_custom_call.1} parent=47 // pred_check
          %p2252 = pneg %p194
        $region74: #{tpu_custom_call.1} parent=47 // pred_check_branch
          %2254 = sbr.rel (%p2252) target = $region76
        $region75: #{tpu_custom_call.1} parent=47 // pred_region
          %s2255 = smul.u32 2, %s24
        $region76: #{tpu_custom_call.1} parent=47 // pred_fallthru
          _
      $region48: #{tpu_custom_call.1} parent=5 // pred_fallthru
        _
      %p2256 = scmp.le.s32.totalorder 2, %s19
      // Predicated region
      $region77: #{tpu_custom_call.1} parent=5 // pred_check
        %p2257 = pneg %p2256
      $region78: #{tpu_custom_call.1} parent=5 // pred_check_branch
        %2259 = sbr.rel (%p2257) target = $region80
      $region79: #{tpu_custom_call.1} parent=5 // pred_region
        %s2260 = ssub.s32 %s19, 2
        // Predicated region
        $region81: #{tpu_custom_call.1} parent=79 // pred_check
          %p2261 = pneg %p200
        $region82: #{tpu_custom_call.1} parent=79 // pred_check_branch
          %2263 = sbr.rel (%p2261) target = $region84
        $region83: #{tpu_custom_call.1} parent=79 // pred_region
          %s2264 = smul.u32 2, %s25
          %p2265 = scmp.lt.s32.totalorder %s2264, 3
          %s2266 = scalar_select %p2265, %s2264, 3
          %s2267 = smul.addr %s2266, 8
          %s2268 = scalar_lea.vmem %s7, %s2267
        $region84: #{tpu_custom_call.1} parent=79 // pred_fallthru
          _
      $region80: #{tpu_custom_call.1} parent=5 // pred_fallthru
        _
    $region6: #{tpu_custom_call.1} parent=1 // loop_footer
      %s23 = sadd.s32 1, %s19
    $region7: #{tpu_custom_call.1} parent=1 // loop_footer_branch
      %18 = sbr.rel target = $region3
    $region8: #{tpu_custom_call.1} parent=1 // loop_exit
      _
    %2269 = vsyncpa [#allocation3], 1
    %s2270 = scalar_lea.sflag [#allocation3], 1
    %2271 = vsyncpa %s2270, 1
    %2272 = vsyncpa [#allocation6], 1
    %2273 = vsyncpa [#allocation9], 1
    %2274 = vsyncpa [#allocation4], 1
    %s2275 = scalar_lea.sflag [#allocation4], 1
    %2276 = vsyncpa %s2275, 1

</llo_original>
